<compile_context>
chip_gen: v6e
topology: v6e:2x2x1
jax: 0.10.0
libtpu: 0.0.40
codegen_flags: <defaults>
</compile_context>

<pallas_src>
import math
import functools

import jax
import jax.numpy as jnp
from jax.experimental import pallas as pl
from jax.experimental.pallas import tpu as pltpu

HIDDEN_DIM = 256   # hardcoded `hidden_dim` in the PyTorch module (state_mlp width)
T_DIM = 16         # hardcoded `t_dim` in the PyTorch module


# --------------------------------------------------------------------------- #
# Kernel
# --------------------------------------------------------------------------- #
def _lstm_rnn_kernel(x_ref, t_ref, s_ref, w_ref, b_ref, o_ref, *,
                     hidden_size, action_dim, state_dim, offs):
    f32 = jnp.float32
    bf16 = jnp.bfloat16
    H = hidden_size
    A = action_dim
    half = T_DIM // 2
    ao = -(-A // 8) * 8            # sublane-aligned row count for the output head

    def mm(a, w):
        # bf16 x bf16 MXU matmul with f32 accumulation.
        return jnp.dot(a.astype(bf16), w, preferred_element_type=f32)

    def sigmoid(v):
        # exact logistic via tanh -> stays on the EUP slot, no VPU divide
        return 0.5 * (jnp.tanh(0.5 * v) + 1.0)

    # ---- activations (tiny f32 VMEM operands, no wrapper repack needed) ------
    x = x_ref[...]                                   # (B, A)
    t_in = t_ref[...]                                # (B, 1)
    state = s_ref[...]                               # (B, S)

    # ---- biases / constants (f32) --------------------------------------------
    b0    = b_ref[0:1, :]                            # (1, 3H) (sm_b2 folded in)
    b1    = b_ref[1:2, :]
    b2    = b_ref[2:3, :]
    sm_b1 = b_ref[3:4, 0:HIDDEN_DIM]
    tm_b1 = b_ref[4:5, 0:2 * T_DIM]
    tm_b2 = b_ref[5:6, 0:T_DIM]
    out_b = b_ref[6:7, 0:A]
    freqs = b_ref[7:8, 0:half]

    # ---- weights (bf16) via static, 16-aligned row sections ------------------
    w_x    = w_ref[offs["w_x"]:offs["w_x"] + A, :]                       # (A, 3H)
    w_t    = w_ref[offs["w_t"]:offs["w_t"] + T_DIM, :]                   # (16, 3H)
    w_fold = w_ref[offs["w_fold"]:offs["w_fold"] + HIDDEN_DIM, :]        # (256, 3H)
    w_l1   = w_ref[offs["w_l1"]:offs["w_l1"] + H, :]                     # (H, 3H)
    w_l2   = w_ref[offs["w_l2"]:offs["w_l2"] + H, :]                     # (H, 3H)
    sm_w1  = w_ref[offs["sm_w1"]:offs["sm_w1"] + state_dim, 0:HIDDEN_DIM]
    tw1s   = w_ref[offs["tw1s"]:offs["tw1s"] + half, 0:2 * T_DIM]
    tw1c   = w_ref[offs["tw1c"]:offs["tw1c"] + half, 0:2 * T_DIM]
    tw2    = w_ref[offs["tw2"]:offs["tw2"] + 2 * T_DIM, 0:T_DIM]
    out_wt = w_ref[offs["out_wt"]:offs["out_wt"] + ao, 0:H]   # (ao, H), rows >= A are 0

    # ---- time_mlp: SinusoidalPosEmb(16) -> Linear(16,32) -> ReLU -> Linear(32,16)
    arg = t_in * freqs                                                   # (B, 8)
    t1 = jnp.maximum(mm(jnp.sin(arg), tw1s) + mm(jnp.cos(arg), tw1c) + tm_b1, 0.0)
    t_emb = mm(t1, tw2) + tm_b2                                          # (B, 16)

    # ---- state_mlp first Linear + ReLU (second Linear folded into layer 0) ---
    h1 = jnp.maximum(mm(state, sm_w1) + sm_b1, 0.0)                      # (B, 256)

    def gates_to_h(g):
        # gate columns packed [i, g, o]; forget gate dropped offline (c0 = 0).
        c = sigmoid(g[:, 0:H]) * jnp.tanh(g[:, H:2 * H])
        return sigmoid(g[:, 2 * H:3 * H]) * jnp.tanh(c)

    # ---- LSTM layer 0: cat([x, t, state_branch]) @ W_ih0 done as 3 matmuls ---
    g0 = mm(x, w_x) + mm(t_emb, w_t) + mm(h1, w_fold) + b0
    h = gates_to_h(g0)

    # ---- LSTM layers 1, 2 (W_hh @ h_prev term is exactly zero) ---------------
    h = gates_to_h(mm(h, w_l1) + b1)
    h = gates_to_h(mm(h, w_l2) + b2)

    # ---- output head: weight stored transposed -> trans-B MXU contraction ----
    logits = jax.lax.dot_general(h.astype(bf16), out_wt,
                                 (((1,), (1,)), ((), ())),
                                 preferred_element_type=f32)             # (B, ao)
    o_ref[...] = logits[:, 0:A] + out_b


# --------------------------------------------------------------------------- #
# Parameter construction (PyTorch-layout) and one-time packing
# --------------------------------------------------------------------------- #
def init_params(key, action_dim, state_dim, hidden_size):
    """Deterministic synthetic parameters (shapes match the PyTorch module)."""
    input_size = HIDDEN_DIM + action_dim + T_DIM
    keys = jax.random.split(key, 16)
    scale = 0.05

    def w(k, shape):
        return jax.random.normal(k, shape, jnp.float32) * scale

    return {
        "sm_w1": w(keys[0], (state_dim, HIDDEN_DIM)),
        "sm_b1": w(keys[1], (1, HIDDEN_DIM)),
        "sm_w2": w(keys[2], (HIDDEN_DIM, HIDDEN_DIM)),
        "sm_b2": w(keys[3], (1, HIDDEN_DIM)),
        "tm_w1": w(keys[4], (T_DIM, 2 * T_DIM)),
        "tm_b1": w(keys[5], (1, 2 * T_DIM)),
        "tm_w2": w(keys[6], (2 * T_DIM, T_DIM)),
        "tm_b2": w(keys[7], (1, T_DIM)),
        # LSTM: W_ih transposed to [in, 4H]; biases are b_ih + b_hh combined.
        "wih0": w(keys[8], (input_size, 4 * hidden_size)),
        "b0":   w(keys[9], (1, 4 * hidden_size)),
        "wih1": w(keys[10], (hidden_size, 4 * hidden_size)),
        "b1":   w(keys[11], (1, 4 * hidden_size)),
        "wih2": w(keys[12], (hidden_size, 4 * hidden_size)),
        "b2":   w(keys[13], (1, 4 * hidden_size)),
        "out_w": w(keys[14], (hidden_size, action_dim)),
        "out_b": w(keys[15], (1, action_dim)),
    }


def prepare_params(params, *, action_dim, state_dim, hidden_size):
    """One-time packing: forget-gate drop, sm_w2 fold, bf16 cast, DMA packs."""
    H = hidden_size
    W = 3 * H                                   # packed lane width (i, g, o gates)
    A = action_dim
    half = T_DIM // 2
    assert W % 128 == 0 and W >= HIDDEN_DIM, "3*hidden_size must be lane-aligned and >= 256"

    def drop_f(w):  # keep [i, g, o] columns of a (..., 4H) LSTM weight / bias
        return jnp.concatenate([w[..., :H], w[..., 2 * H:]], axis=-1)

    wih0 = drop_f(params["wih0"])               # (A + 16 + 256, 3H)
    wih1 = drop_f(params["wih1"])
    wih2 = drop_f(params["wih2"])
    b0 = drop_f(params["b0"])
    b1 = drop_f(params["b1"])
    b2 = drop_f(params["b2"])

    wih0_x = wih0[:A]
    wih0_t = wih0[A:A + T_DIM]
    wih0_s = wih0[A + T_DIM:]

    # Fold state_mlp's second Linear into LSTM layer 0 (exact up to reassociation):
    #   (relu(.)@sm_w2 + sm_b2) @ wih0_s == relu(.) @ (sm_w2@wih0_s) + sm_b2@wih0_s
    w_fold = params["sm_w2"] @ wih0_s                         # (256, 3H)
    b0_fold = b0 + params["sm_b2"] @ wih0_s                   # (1, 3H)

    sections = [
        ("w_x", wih0_x),
        ("w_t", wih0_t),
        ("w_fold", w_fold),
        ("w_l1", wih1),
        ("w_l2", wih2),
        ("sm_w1", params["sm_w1"]),
        ("tw1s", params["tm_w1"][:half]),
        ("tw1c", params["tm_w1"][half:]),
        ("tw2", params["tm_w2"]),
        ("out_wt", params["out_w"].T),          # (A, H): head stored transposed
    ]
    offs, rows, r = {}, [], 0
    for name, arr in sections:
        offs[name] = r
        padded_r = -(-arr.shape[0] // 16) * 16     # 16-align (bf16 sublane tile)
        rows.append(jnp.pad(arr, ((0, padded_r - arr.shape[0]),
                                  (0, W - arr.shape[1]))))
        r += padded_r
    wpack = jnp.concatenate(rows, axis=0).astype(jnp.bfloat16)   # (R, 3H) bf16

    def row(v):
        v = jnp.asarray(v, jnp.float32).reshape(1, -1)
        return jnp.pad(v, ((0, 0), (0, W - v.shape[1])))

    freqs = jnp.exp(jnp.arange(half, dtype=jnp.float32)
                    * -(math.log(10000.0) / (half - 1)))
    bpack = jnp.concatenate([
        row(b0_fold), row(b1), row(b2), row(params["sm_b1"]),
        row(params["tm_b1"]), row(params["tm_b2"]),
        row(params["out_b"]), row(freqs)], axis=0)               # (8, 3H) f32

    return {"wpack": wpack, "bpack": bpack, "offsets": tuple(offs.items())}


# --------------------------------------------------------------------------- #
# Forward wrapper — one jitted program containing only the pallas_call
# --------------------------------------------------------------------------- #
@functools.partial(jax.jit,
                   static_argnames=("offsets", "action_dim", "state_dim",
                                    "hidden_size"))
def lstm_rnn_forward(x, time, state, wpack, bpack, *, offsets,
                     action_dim, state_dim, hidden_size):
    B = x.shape[0]
    kernel = functools.partial(
        _lstm_rnn_kernel, hidden_size=hidden_size, action_dim=action_dim,
        state_dim=state_dim, offs=dict(offsets))
    vmem = pl.BlockSpec(memory_space=pltpu.MemorySpace.VMEM)

    # Everything fits comfortably in VMEM (~0.5 MB): gridless single invocation
    # with whole-array VMEM blocks (5 small input DMAs + 1 output, no grid).
    return pl.pallas_call(
        kernel,
        out_shape=jax.ShapeDtypeStruct((B, action_dim), jnp.float32),
        in_specs=[vmem, vmem, vmem, vmem, vmem],
        out_specs=vmem,
    )(x.astype(jnp.float32),
      time.reshape(B, 1).astype(jnp.float32),
      state.astype(jnp.float32),
      wpack, bpack)


# --------------------------------------------------------------------------- #
# Pure-JAX reference (mirrors the PyTorch forward, f32, full 4-gate LSTM)
# --------------------------------------------------------------------------- #
def lstm_rnn_reference(x, time, state, params, *, hidden_size):
    half = T_DIM // 2
    emb = math.log(10000.0) / (half - 1)
    freqs = jnp.exp(jnp.arange(half, dtype=jnp.float32) * -emb)
    arg = time.astype(jnp.float32)[:, None] * freqs[None, :]
    temb = jnp.concatenate([jnp.sin(arg), jnp.cos(arg)], axis=-1)
    t = (jnp.maximum(temb @ params["tm_w1"] + params["tm_b1"], 0.0)
         @ params["tm_w2"] + params["tm_b2"])
    ps = (jnp.maximum(state @ params["sm_w1"] + params["sm_b1"], 0.0)
          @ params["sm_w2"] + params["sm_b2"])
    inp = jnp.concatenate([x, t, ps], axis=-1)
    H = hidden_size

    def cell(h_in, wih, b):
        g = h_in @ wih + b
        i = jax.nn.sigmoid(g[:, 0:H])
        gg = jnp.tanh(g[:, 2 * H:3 * H])
        o = jax.nn.sigmoid(g[:, 3 * H:4 * H])
        return o * jnp.tanh(i * gg)

    h = cell(inp, params["wih0"], params["b0"])
    h = cell(h, params["wih1"], params["b1"])
    h = cell(h, params["wih2"], params["b2"])
    return h @ params["out_w"] + params["out_b"]


if __name__ == "__main__":
    key = jax.random.PRNGKey(0)
    k_param, k_x, k_t, k_s = jax.random.split(key, 4)

    B, ACTION_DIM, STATE_DIM, HIDDEN_SIZE = 2, 4, 8, 128
    params = init_params(k_param, ACTION_DIM, STATE_DIM, HIDDEN_SIZE)
    packed = prepare_params(params, action_dim=ACTION_DIM,
                            state_dim=STATE_DIM, hidden_size=HIDDEN_SIZE)

    x = jax.random.normal(k_x, (B, ACTION_DIM), jnp.float32)
    time = jax.random.uniform(k_t, (B,), jnp.float32, 0.0, 100.0)
    state = jax.random.normal(k_s, (B, STATE_DIM), jnp.float32)

    out = jax.block_until_ready(
        lstm_rnn_forward(x, time, state, packed["wpack"], packed["bpack"],
                         offsets=packed["offsets"], action_dim=ACTION_DIM,
                         state_dim=STATE_DIM, hidden_size=HIDDEN_SIZE))
    ref = lstm_rnn_reference(x, time, state, params, hidden_size=HIDDEN_SIZE)

    assert out.shape == (B, ACTION_DIM), out.shape
    # bf16 weights in the kernel vs f32 reference -> slightly loosened tolerance.
    assert jnp.allclose(out, ref, rtol=1e-2, atol=1e-2), (out, ref)
    print("KERNEL_OK")
</pallas_src>

<mosaic_0001>
module attributes {stable_mosaic.version = 11 : i64} {
  func.func @_lstm_rnn_kernel(%arg0: memref<2x4xf32, #tpu.memory_space<vmem>>, %arg1: memref<2x1xf32, #tpu.memory_space<vmem>>, %arg2: memref<2x8xf32, #tpu.memory_space<vmem>>, %arg3: memref<640x384xbf16, #tpu.memory_space<vmem>>, %arg4: memref<8x384xf32, #tpu.memory_space<vmem>>, %arg5: memref<2x4xf32, #tpu.memory_space<vmem>>) attributes {dimension_semantics = [], scalar_prefetch = 0 : i64, scratch_operands = 0 : i64, tpu.core_type = #tpu.core_type<tc>} {
    %c0 = arith.constant 0 : index
    %c0_0 = arith.constant 0 : index
    %0 = vector.load %arg0[%c0, %c0_0] : memref<2x4xf32, #tpu.memory_space<vmem>>, vector<2x4xf32>
    %c0_1 = arith.constant 0 : index
    %c0_2 = arith.constant 0 : index
    %1 = vector.load %arg1[%c0_1, %c0_2] : memref<2x1xf32, #tpu.memory_space<vmem>>, vector<2x1xf32>
    %c0_3 = arith.constant 0 : index
    %c0_4 = arith.constant 0 : index
    %2 = vector.load %arg2[%c0_3, %c0_4] : memref<2x8xf32, #tpu.memory_space<vmem>>, vector<2x8xf32>
    %c0_5 = arith.constant 0 : index
    %c0_6 = arith.constant 0 : index
    %3 = vector.load %arg4[%c0_5, %c0_6] : memref<8x384xf32, #tpu.memory_space<vmem>>, vector<1x384xf32>
    %c1 = arith.constant 1 : index
    %c0_7 = arith.constant 0 : index
    %4 = vector.load %arg4[%c1, %c0_7] : memref<8x384xf32, #tpu.memory_space<vmem>>, vector<1x384xf32>
    %c2 = arith.constant 2 : index
    %c0_8 = arith.constant 0 : index
    %5 = vector.load %arg4[%c2, %c0_8] : memref<8x384xf32, #tpu.memory_space<vmem>>, vector<1x384xf32>
    %c3 = arith.constant 3 : index
    %c0_9 = arith.constant 0 : index
    %6 = vector.load %arg4[%c3, %c0_9] : memref<8x384xf32, #tpu.memory_space<vmem>>, vector<1x256xf32>
    %c4 = arith.constant 4 : index
    %c0_10 = arith.constant 0 : index
    %7 = vector.load %arg4[%c4, %c0_10] : memref<8x384xf32, #tpu.memory_space<vmem>>, vector<1x32xf32>
    %c5 = arith.constant 5 : index
    %c0_11 = arith.constant 0 : index
    %8 = vector.load %arg4[%c5, %c0_11] : memref<8x384xf32, #tpu.memory_space<vmem>>, vector<1x16xf32>
    %c6 = arith.constant 6 : index
    %c0_12 = arith.constant 0 : index
    %9 = vector.load %arg4[%c6, %c0_12] : memref<8x384xf32, #tpu.memory_space<vmem>>, vector<1x4xf32>
    %c7 = arith.constant 7 : index
    %c0_13 = arith.constant 0 : index
    %10 = vector.load %arg4[%c7, %c0_13] : memref<8x384xf32, #tpu.memory_space<vmem>>, vector<1x8xf32>
    %c0_14 = arith.constant 0 : index
    %c0_15 = arith.constant 0 : index
    %11 = vector.load %arg3[%c0_14, %c0_15] : memref<640x384xbf16, #tpu.memory_space<vmem>>, vector<4x384xbf16>
    %c16 = arith.constant 16 : index
    %c0_16 = arith.constant 0 : index
    %12 = vector.load %arg3[%c16, %c0_16] : memref<640x384xbf16, #tpu.memory_space<vmem>>, vector<16x384xbf16>
    %c32 = arith.constant 32 : index
    %c0_17 = arith.constant 0 : index
    %13 = vector.load %arg3[%c32, %c0_17] : memref<640x384xbf16, #tpu.memory_space<vmem>>, vector<256x384xbf16>
    %c288 = arith.constant 288 : index
    %c0_18 = arith.constant 0 : index
    %14 = vector.load %arg3[%c288, %c0_18] : memref<640x384xbf16, #tpu.memory_space<vmem>>, vector<128x384xbf16>
    %c416 = arith.constant 416 : index
    %c0_19 = arith.constant 0 : index
    %15 = vector.load %arg3[%c416, %c0_19] : memref<640x384xbf16, #tpu.memory_space<vmem>>, vector<128x384xbf16>
    %c544 = arith.constant 544 : index
    %c0_20 = arith.constant 0 : index
    %16 = vector.load %arg3[%c544, %c0_20] : memref<640x384xbf16, #tpu.memory_space<vmem>>, vector<8x256xbf16>
    %c560 = arith.constant 560 : index
    %c0_21 = arith.constant 0 : index
    %17 = vector.load %arg3[%c560, %c0_21] : memref<640x384xbf16, #tpu.memory_space<vmem>>, vector<8x32xbf16>
    %c576 = arith.constant 576 : index
    %c0_22 = arith.constant 0 : index
    %18 = vector.load %arg3[%c576, %c0_22] : memref<640x384xbf16, #tpu.memory_space<vmem>>, vector<8x32xbf16>
    %c592 = arith.constant 592 : index
    %c0_23 = arith.constant 0 : index
    %19 = vector.load %arg3[%c592, %c0_23] : memref<640x384xbf16, #tpu.memory_space<vmem>>, vector<32x16xbf16>
    %c624 = arith.constant 624 : index
    %c0_24 = arith.constant 0 : index
    %20 = vector.load %arg3[%c624, %c0_24] : memref<640x384xbf16, #tpu.memory_space<vmem>>, vector<8x128xbf16>
    %21 = vector.broadcast %1 : vector<2x1xf32> to vector<2x8xf32>
    %22 = vector.broadcast %10 : vector<1x8xf32> to vector<2x8xf32>
    %23 = arith.mulf %21, %22 : vector<2x8xf32>
    %24 = math.sin %23 : vector<2x8xf32>
    %25 = arith.truncf %24 : vector<2x8xf32> to vector<2x8xbf16>
    %cst = arith.constant dense<0.000000e+00> : vector<2x32xf32>
    %26 = tpu.matmul %25, %17, %cst {dimension_numbers = #tpu.dot_dimension_numbers<[1], [0], [0], [1], [0, 0, 1, 1], [], []>} : vector<2x8xbf16>, vector<8x32xbf16>, vector<2x32xf32> -> vector<2x32xf32>
    %27 = math.cos %23 : vector<2x8xf32>
    %28 = arith.truncf %27 : vector<2x8xf32> to vector<2x8xbf16>
    %cst_25 = arith.constant dense<0.000000e+00> : vector<2x32xf32>
    %29 = tpu.matmul %28, %18, %cst_25 {dimension_numbers = #tpu.dot_dimension_numbers<[1], [0], [0], [1], [0, 0, 1, 1], [], []>} : vector<2x8xbf16>, vector<8x32xbf16>, vector<2x32xf32> -> vector<2x32xf32>
    %30 = arith.addf %26, %29 : vector<2x32xf32>
    %31 = vector.broadcast %7 : vector<1x32xf32> to vector<2x32xf32>
    %32 = arith.addf %30, %31 : vector<2x32xf32>
    %cst_26 = arith.constant 0.000000e+00 : f32
    %33 = vector.broadcast %cst_26 : f32 to vector<2x32xf32>
    %34 = arith.maximumf %32, %33 : vector<2x32xf32>
    %35 = arith.truncf %34 : vector<2x32xf32> to vector<2x32xbf16>
    %cst_27 = arith.constant dense<0.000000e+00> : vector<2x16xf32>
    %36 = tpu.matmul %35, %19, %cst_27 {dimension_numbers = #tpu.dot_dimension_numbers<[1], [0], [0], [1], [0, 0, 1, 1], [], []>} : vector<2x32xbf16>, vector<32x16xbf16>, vector<2x16xf32> -> vector<2x16xf32>
    %37 = vector.broadcast %8 : vector<1x16xf32> to vector<2x16xf32>
    %38 = arith.addf %36, %37 : vector<2x16xf32>
    %39 = arith.truncf %2 : vector<2x8xf32> to vector<2x8xbf16>
    %cst_28 = arith.constant dense<0.000000e+00> : vector<2x256xf32>
    %40 = tpu.matmul %39, %16, %cst_28 {dimension_numbers = #tpu.dot_dimension_numbers<[1], [0], [0], [1], [0, 0, 1, 1], [], []>} : vector<2x8xbf16>, vector<8x256xbf16>, vector<2x256xf32> -> vector<2x256xf32>
    %41 = vector.broadcast %6 : vector<1x256xf32> to vector<2x256xf32>
    %42 = arith.addf %40, %41 : vector<2x256xf32>
    %cst_29 = arith.constant 0.000000e+00 : f32
    %43 = vector.broadcast %cst_29 : f32 to vector<2x256xf32>
    %44 = arith.maximumf %42, %43 : vector<2x256xf32>
    %45 = arith.truncf %0 : vector<2x4xf32> to vector<2x4xbf16>
    %cst_30 = arith.constant dense<0.000000e+00> : vector<2x384xf32>
    %46 = tpu.matmul %45, %11, %cst_30 {dimension_numbers = #tpu.dot_dimension_numbers<[1], [0], [0], [1], [0, 0, 1, 1], [], []>} : vector<2x4xbf16>, vector<4x384xbf16>, vector<2x384xf32> -> vector<2x384xf32>
    %47 = arith.truncf %38 : vector<2x16xf32> to vector<2x16xbf16>
    %cst_31 = arith.constant dense<0.000000e+00> : vector<2x384xf32>
    %48 = tpu.matmul %47, %12, %cst_31 {dimension_numbers = #tpu.dot_dimension_numbers<[1], [0], [0], [1], [0, 0, 1, 1], [], []>} : vector<2x16xbf16>, vector<16x384xbf16>, vector<2x384xf32> -> vector<2x384xf32>
    %49 = arith.addf %46, %48 : vector<2x384xf32>
    %50 = arith.truncf %44 : vector<2x256xf32> to vector<2x256xbf16>
    %cst_32 = arith.constant dense<0.000000e+00> : vector<2x384xf32>
    %51 = tpu.matmul %50, %13, %cst_32 {dimension_numbers = #tpu.dot_dimension_numbers<[1], [0], [0], [1], [0, 0, 1, 1], [], []>} : vector<2x256xbf16>, vector<256x384xbf16>, vector<2x384xf32> -> vector<2x384xf32>
    %52 = arith.addf %49, %51 : vector<2x384xf32>
    %53 = vector.broadcast %3 : vector<1x384xf32> to vector<2x384xf32>
    %54 = arith.addf %52, %53 : vector<2x384xf32>
    %55 = vector.extract_strided_slice %54 {offsets = [0, 0], sizes = [2, 128], strides = [1, 1]} : vector<2x384xf32> to vector<2x128xf32>
    %cst_33 = arith.constant 5.000000e-01 : f32
    %56 = vector.broadcast %cst_33 : f32 to vector<2x128xf32>
    %57 = arith.mulf %56, %55 : vector<2x128xf32>
    %58 = math.tanh %57 : vector<2x128xf32>
    %cst_34 = arith.constant 1.000000e+00 : f32
    %59 = vector.broadcast %cst_34 : f32 to vector<2x128xf32>
    %60 = arith.addf %58, %59 : vector<2x128xf32>
    %cst_35 = arith.constant 5.000000e-01 : f32
    %61 = vector.broadcast %cst_35 : f32 to vector<2x128xf32>
    %62 = arith.mulf %61, %60 : vector<2x128xf32>
    %63 = vector.extract_strided_slice %54 {offsets = [0, 128], sizes = [2, 128], strides = [1, 1]} : vector<2x384xf32> to vector<2x128xf32>
    %64 = math.tanh %63 : vector<2x128xf32>
    %65 = arith.mulf %62, %64 : vector<2x128xf32>
    %66 = vector.extract_strided_slice %54 {offsets = [0, 256], sizes = [2, 128], strides = [1, 1]} : vector<2x384xf32> to vector<2x128xf32>
    %cst_36 = arith.constant 5.000000e-01 : f32
    %67 = vector.broadcast %cst_36 : f32 to vector<2x128xf32>
    %68 = arith.mulf %67, %66 : vector<2x128xf32>
    %69 = math.tanh %68 : vector<2x128xf32>
    %cst_37 = arith.constant 1.000000e+00 : f32
    %70 = vector.broadcast %cst_37 : f32 to vector<2x128xf32>
    %71 = arith.addf %69, %70 : vector<2x128xf32>
    %cst_38 = arith.constant 5.000000e-01 : f32
    %72 = vector.broadcast %cst_38 : f32 to vector<2x128xf32>
    %73 = arith.mulf %72, %71 : vector<2x128xf32>
    %74 = math.tanh %65 : vector<2x128xf32>
    %75 = arith.mulf %73, %74 : vector<2x128xf32>
    %76 = arith.truncf %75 : vector<2x128xf32> to vector<2x128xbf16>
    %cst_39 = arith.constant dense<0.000000e+00> : vector<2x384xf32>
    %77 = tpu.matmul %76, %14, %cst_39 {dimension_numbers = #tpu.dot_dimension_numbers<[1], [0], [0], [1], [0, 0, 1, 1], [], []>} : vector<2x128xbf16>, vector<128x384xbf16>, vector<2x384xf32> -> vector<2x384xf32>
    %78 = vector.broadcast %4 : vector<1x384xf32> to vector<2x384xf32>
    %79 = arith.addf %77, %78 : vector<2x384xf32>
    %80 = vector.extract_strided_slice %79 {offsets = [0, 0], sizes = [2, 128], strides = [1, 1]} : vector<2x384xf32> to vector<2x128xf32>
    %cst_40 = arith.constant 5.000000e-01 : f32
    %81 = vector.broadcast %cst_40 : f32 to vector<2x128xf32>
    %82 = arith.mulf %81, %80 : vector<2x128xf32>
    %83 = math.tanh %82 : vector<2x128xf32>
    %cst_41 = arith.constant 1.000000e+00 : f32
    %84 = vector.broadcast %cst_41 : f32 to vector<2x128xf32>
    %85 = arith.addf %83, %84 : vector<2x128xf32>
    %cst_42 = arith.constant 5.000000e-01 : f32
    %86 = vector.broadcast %cst_42 : f32 to vector<2x128xf32>
    %87 = arith.mulf %86, %85 : vector<2x128xf32>
    %88 = vector.extract_strided_slice %79 {offsets = [0, 128], sizes = [2, 128], strides = [1, 1]} : vector<2x384xf32> to vector<2x128xf32>
    %89 = math.tanh %88 : vector<2x128xf32>
    %90 = arith.mulf %87, %89 : vector<2x128xf32>
    %91 = vector.extract_strided_slice %79 {offsets = [0, 256], sizes = [2, 128], strides = [1, 1]} : vector<2x384xf32> to vector<2x128xf32>
    %cst_43 = arith.constant 5.000000e-01 : f32
    %92 = vector.broadcast %cst_43 : f32 to vector<2x128xf32>
    %93 = arith.mulf %92, %91 : vector<2x128xf32>
    %94 = math.tanh %93 : vector<2x128xf32>
    %cst_44 = arith.constant 1.000000e+00 : f32
    %95 = vector.broadcast %cst_44 : f32 to vector<2x128xf32>
    %96 = arith.addf %94, %95 : vector<2x128xf32>
    %cst_45 = arith.constant 5.000000e-01 : f32
    %97 = vector.broadcast %cst_45 : f32 to vector<2x128xf32>
    %98 = arith.mulf %97, %96 : vector<2x128xf32>
    %99 = math.tanh %90 : vector<2x128xf32>
    %100 = arith.mulf %98, %99 : vector<2x128xf32>
    %101 = arith.truncf %100 : vector<2x128xf32> to vector<2x128xbf16>
    %cst_46 = arith.constant dense<0.000000e+00> : vector<2x384xf32>
    %102 = tpu.matmul %101, %15, %cst_46 {dimension_numbers = #tpu.dot_dimension_numbers<[1], [0], [0], [1], [0, 0, 1, 1], [], []>} : vector<2x128xbf16>, vector<128x384xbf16>, vector<2x384xf32> -> vector<2x384xf32>
    %103 = vector.broadcast %5 : vector<1x384xf32> to vector<2x384xf32>
    %104 = arith.addf %102, %103 : vector<2x384xf32>
    %105 = vector.extract_strided_slice %104 {offsets = [0, 0], sizes = [2, 128], strides = [1, 1]} : vector<2x384xf32> to vector<2x128xf32>
    %cst_47 = arith.constant 5.000000e-01 : f32
    %106 = vector.broadcast %cst_47 : f32 to vector<2x128xf32>
    %107 = arith.mulf %106, %105 : vector<2x128xf32>
    %108 = math.tanh %107 : vector<2x128xf32>
    %cst_48 = arith.constant 1.000000e+00 : f32
    %109 = vector.broadcast %cst_48 : f32 to vector<2x128xf32>
    %110 = arith.addf %108, %109 : vector<2x128xf32>
    %cst_49 = arith.constant 5.000000e-01 : f32
    %111 = vector.broadcast %cst_49 : f32 to vector<2x128xf32>
    %112 = arith.mulf %111, %110 : vector<2x128xf32>
    %113 = vector.extract_strided_slice %104 {offsets = [0, 128], sizes = [2, 128], strides = [1, 1]} : vector<2x384xf32> to vector<2x128xf32>
    %114 = math.tanh %113 : vector<2x128xf32>
    %115 = arith.mulf %112, %114 : vector<2x128xf32>
    %116 = vector.extract_strided_slice %104 {offsets = [0, 256], sizes = [2, 128], strides = [1, 1]} : vector<2x384xf32> to vector<2x128xf32>
    %cst_50 = arith.constant 5.000000e-01 : f32
    %117 = vector.broadcast %cst_50 : f32 to vector<2x128xf32>
    %118 = arith.mulf %117, %116 : vector<2x128xf32>
    %119 = math.tanh %118 : vector<2x128xf32>
    %cst_51 = arith.constant 1.000000e+00 : f32
    %120 = vector.broadcast %cst_51 : f32 to vector<2x128xf32>
    %121 = arith.addf %119, %120 : vector<2x128xf32>
    %cst_52 = arith.constant 5.000000e-01 : f32
    %122 = vector.broadcast %cst_52 : f32 to vector<2x128xf32>
    %123 = arith.mulf %122, %121 : vector<2x128xf32>
    %124 = math.tanh %115 : vector<2x128xf32>
    %125 = arith.mulf %123, %124 : vector<2x128xf32>
    %126 = arith.truncf %125 : vector<2x128xf32> to vector<2x128xbf16>
    %cst_53 = arith.constant dense<0.000000e+00> : vector<2x8xf32>
    %127 = tpu.matmul %126, %20, %cst_53 {dimension_numbers = #tpu.dot_dimension_numbers<[1], [1], [0], [0], [0, 0, 1, 0], [], []>} : vector<2x128xbf16>, vector<8x128xbf16>, vector<2x8xf32> -> vector<2x8xf32>
    %128 = vector.extract_strided_slice %127 {offsets = [0, 0], sizes = [2, 4], strides = [1, 1]} : vector<2x8xf32> to vector<2x4xf32>
    %129 = vector.broadcast %9 : vector<1x4xf32> to vector<2x4xf32>
    %130 = arith.addf %128, %129 : vector<2x4xf32>
    %c0_54 = arith.constant 0 : index
    %c0_55 = arith.constant 0 : index
    %131 = vector.load %arg5[%c0_54, %c0_55] : memref<2x4xf32, #tpu.memory_space<vmem>>, vector<2x4xf32>
    tpu.vector_store %arg5[%c0_54, %c0_55], %130 {strides = array<i32>} : memref<2x4xf32, #tpu.memory_space<vmem>>, vector<2x4xf32>,
    return
  }
}

</mosaic_0001>

<llo_original>
// kernel: lstm_rnn_forward.1
$region0: #{lstm_rnn_forward.1}
  #allocation0 [shape = 'u32[]', space=smem, size = 0x4, offset = 0x4, fixed_abs, tag = 'smem constant byte address 0x4 - core index']
  #allocation1 [shape = 'u32[144,128]{1,0:T(1,128)}', space=vmem, size = 0x12000, scoped, tag = 'internal scratch']
  %s0 = inlined_call_operand.vmem [shape: f32[2,4], index: 0, kind: input, shape index: {}]
  %s1 = inlined_call_operand.vmem [shape: f32[2,1], index: 1, kind: input, shape index: {}]
  %s2 = inlined_call_operand.vmem [shape: f32[2,8], index: 2, kind: input, shape index: {}]
  %s3 = inlined_call_operand.hbm [shape: bf16[640,384], index: 3, kind: input, shape index: {}]
  %s4 = inlined_call_operand.hbm [shape: f32[8,384], index: 4, kind: input, shape index: {}]
  %s5 = inlined_call_operand.hbm [shape: f32[2,4], index: 5, kind: output, shape index: {}]
  %s6 = sld [smem:[#allocation0]]
  $region38: #{lstm_rnn_forward.1} parent=0
    _
  %s8 = ssub.s32 1, %s6
  %s9 = scalar_select 0, %s8, %s6
  $region1: #{lstm_rnn_forward.1} parent=0
    #allocation2 [shape = 'u8[491520]{0}', space=vmem, size = 0x78000, scoped, tag = 'input window, operand 3, single buffered']
    #allocation3 [shape = 's32[1]{0}', space=sflag, size = 0x4, scoped, tag = 'scoped memory for lstm_rnn_forward.1']
    #allocation4 [shape = 's32[1]{0}', space=sflag, size = 0x4, scoped, tag = 'scoped memory for lstm_rnn_forward.1']
    #allocation5 [shape = 'u8[12288]{0}', space=vmem, size = 0x3000, scoped, tag = 'input window, operand 4, single buffered']
    #allocation6 [shape = 's32[1]{0}', space=sflag, size = 0x4, scoped, tag = 'scoped memory for lstm_rnn_forward.1']
    #allocation7 [shape = 'u8[1024]{0}', space=vmem, size = 0x400, scoped, tag = 'output window, operand 0, single buffered']
    %10 = vsyncpa [#allocation3], 0
    %11 = vsyncpa [#allocation6], 0
    %12 = vsyncpa [#allocation4], 0
    // Predicated region
    $region2: #{lstm_rnn_forward.1} parent=1 // pred_check
      _
    $region3: #{lstm_rnn_forward.1} parent=1 // pred_check_branch
      %14 = sbr.rel (0) target = $region5
    $region4: #{lstm_rnn_forward.1} parent=1 // pred_region
      _
    $region5: #{lstm_rnn_forward.1} parent=1 // pred_fallthru
      _
    // Predicated region
    $region6: #{lstm_rnn_forward.1} parent=1 // pred_check
      _
    $region7: #{lstm_rnn_forward.1} parent=1 // pred_check_branch
      %16 = sbr.rel (0) target = $region9
    $region8: #{lstm_rnn_forward.1} parent=1 // pred_region
      _
    $region9: #{lstm_rnn_forward.1} parent=1 // pred_fallthru
      _
    // Predicated region
    $region10: #{lstm_rnn_forward.1} parent=1 // pred_check
      _
    $region11: #{lstm_rnn_forward.1} parent=1 // pred_check_branch
      %18 = sbr.rel (0) target = $region13
    $region12: #{lstm_rnn_forward.1} parent=1 // pred_region
      _
    $region13: #{lstm_rnn_forward.1} parent=1 // pred_fallthru
      _
    // Predicated region
    $region14: #{lstm_rnn_forward.1} parent=1 // pred_check
      _
    $region15: #{lstm_rnn_forward.1} parent=1 // pred_check_branch
      %20 = sbr.rel (0) target = $region17
    $region16: #{lstm_rnn_forward.1} parent=1 // pred_region
      %s22 = ssub.s32 15360, 15360
      %23 = vsyncadd [#allocation3], %s22
      %s24 = sshll.u32 [#allocation2], 4
      %s25 = int_to_ptr.vmem [resolvable:$true] %s24
      %30 = dma.hbm_to_vmem [thread:$0]  %s3, 15360, %s25, [#allocation3], 192, 192, 12
    $region17: #{lstm_rnn_forward.1} parent=1 // pred_fallthru
      _
    // Predicated region
    $region18: #{lstm_rnn_forward.1} parent=1 // pred_check
      _
    $region19: #{lstm_rnn_forward.1} parent=1 // pred_check_branch
      %32 = sbr.rel (0) target = $region21
    $region20: #{lstm_rnn_forward.1} parent=1 // pred_region
      %s34 = ssub.s32 384, 384
      %35 = vsyncadd [#allocation6], %s34
      %s37 = sshll.u32 [#allocation5], 4
      %s38 = int_to_ptr.vmem [resolvable:$true] %s37
      %40 = dma.hbm_to_vmem [thread:$0]  %s4, 384, %s38, [#allocation6]
    $region21: #{lstm_rnn_forward.1} parent=1 // pred_fallthru
      _
    // Predicated region
    $region22: #{lstm_rnn_forward.1} parent=1 // pred_check
      _
    $region23: #{lstm_rnn_forward.1} parent=1 // pred_check_branch
      %42 = sbr.rel (0) target = $region25
    $region24: #{lstm_rnn_forward.1} parent=1 // pred_region
      %43 = dma.done [#allocation3], 15360
    $region25: #{lstm_rnn_forward.1} parent=1 // pred_fallthru
      _
    // Predicated region
    $region26: #{lstm_rnn_forward.1} parent=1 // pred_check
      _
    $region27: #{lstm_rnn_forward.1} parent=1 // pred_check_branch
      %45 = sbr.rel (0) target = $region29
    $region28: #{lstm_rnn_forward.1} parent=1 // pred_region
      %46 = dma.done [#allocation6], 384
    $region29: #{lstm_rnn_forward.1} parent=1 // pred_fallthru
      _
    %v48 = vld [vmem:[%s0] sm:$0x3]
    %v49 = vld [vmem:[%s1] sm:$0x3]
    %v50 = vld [vmem:[%s2] sm:$0x3]
    %v51 = vld [vmem:[#allocation5] ss:$8 sm:$0x7]
    %s52 = scalar_lea.vmem [#allocation5], 1
    %v53 = vld [vmem:[%s52] ss:$8 sm:$0x7]
    %s54 = scalar_lea.vmem [#allocation5], 2
    %v55 = vld [vmem:[%s54] ss:$8 sm:$0x7]
    %s56 = scalar_lea.vmem [#allocation5], 3
    %v57 = vld [vmem:[%s56] ss:$8 sm:$0x3]
    %v58 = vld [vmem:[#allocation5 + $0x4] ss:$0 sm:$0xff]
    %v59 = vld [vmem:[#allocation5 + $0x5] ss:$0 sm:$0xff]
    %v60 = vld [vmem:[#allocation5 + $0x6] ss:$0 sm:$0xff]
    %v61 = vld [vmem:[#allocation5 + $0x7] ss:$0 sm:$0xff]
    %v62 = vld [vmem:[#allocation2] sm:$0x33]
    %v63 = vld [vmem:[#allocation2 + $0x8] sm:$0x3]
    %v64 = vld [vmem:[#allocation2 + $0x18] sm:$0xff]
    %v65 = vld [vmem:[#allocation2 + $0x20] sm:$0xf]
    %v66 = vld [vmem:[#allocation2 + $0x24] sm:$0xff]
    %v67 = vld [vmem:[#allocation2 + $0x2c] sm:$0xf]
    %v68 = vld [vmem:[#allocation2 + $0x30] sm:$0xff]
    %v69 = vld [vmem:[#allocation2 + $0x38] sm:$0xf]
    %v70 = vld [vmem:[#allocation2 + $0x3c] sm:$0xff]
    %v71 = vld [vmem:[#allocation2 + $0x44] sm:$0xf]
    %v72 = vld [vmem:[#allocation2 + $0x48] sm:$0xff]
    %v73 = vld [vmem:[#allocation2 + $0x50] sm:$0xf]
    %v74 = vld [vmem:[#allocation2 + $0x54] sm:$0xff]
    %v75 = vld [vmem:[#allocation2 + $0x5c] sm:$0xf]
    %v76 = vld [vmem:[#allocation2 + $0x60] sm:$0xff]
    %v77 = vld [vmem:[#allocation2 + $0x68] sm:$0xf]
    %v78 = vld [vmem:[#allocation2 + $0x6c] sm:$0xff]
    %v79 = vld [vmem:[#allocation2 + $0x74] sm:$0xf]
    %v80 = vld [vmem:[#allocation2 + $0x78] sm:$0xff]
    %v81 = vld [vmem:[#allocation2 + $0x80] sm:$0xf]
    %v82 = vld [vmem:[#allocation2 + $0x84] sm:$0xff]
    %v83 = vld [vmem:[#allocation2 + $0x8c] sm:$0xf]
    %v84 = vld [vmem:[#allocation2 + $0x90] sm:$0xff]
    %v85 = vld [vmem:[#allocation2 + $0x98] sm:$0xf]
    %v86 = vld [vmem:[#allocation2 + $0x9c] sm:$0xff]
    %v87 = vld [vmem:[#allocation2 + $0xa4] sm:$0xf]
    %v88 = vld [vmem:[#allocation2 + $0xa8] sm:$0xff]
    %v89 = vld [vmem:[#allocation2 + $0xb0] sm:$0xf]
    %v90 = vld [vmem:[#allocation2 + $0xb4] sm:$0xff]
    %v91 = vld [vmem:[#allocation2 + $0xbc] sm:$0xf]
    %v92 = vld [vmem:[#allocation2 + $0xc0] sm:$0xff]
    %v93 = vld [vmem:[#allocation2 + $0xc8] sm:$0xf]
    %v94 = vld [vmem:[#allocation2 + $0xcc] sm:$0xff]
    %v95 = vld [vmem:[#allocation2 + $0xd4] sm:$0xf]
    %v96 = vld [vmem:[#allocation2 + $0xd8] sm:$0xff]
    %v97 = vld [vmem:[#allocation2 + $0xe0] sm:$0xf]
    %v98 = vld [vmem:[#allocation2 + $0xe4] sm:$0xff]
    %v99 = vld [vmem:[#allocation2 + $0xec] sm:$0xf]
    %v100 = vld [vmem:[#allocation2 + $0xf0] sm:$0xff]
    %v101 = vld [vmem:[#allocation2 + $0xf8] sm:$0xf]
    %v102 = vld [vmem:[#allocation2 + $0xfc] sm:$0xff]
    %v103 = vld [vmem:[#allocation2 + $0x104] sm:$0xf]
    %v104 = vld [vmem:[#allocation2 + $0x108] sm:$0xff]
    %v105 = vld [vmem:[#allocation2 + $0x110] sm:$0xf]
    %v106 = vld [vmem:[#allocation2 + $0x114] sm:$0xff]
    %v107 = vld [vmem:[#allocation2 + $0x11c] sm:$0xf]
    %v108 = vld [vmem:[#allocation2 + $0x120] sm:$0xff]
    %v109 = vld [vmem:[#allocation2 + $0x128] sm:$0xf]
    %v110 = vld [vmem:[#allocation2 + $0x12c] sm:$0xff]
    %v111 = vld [vmem:[#allocation2 + $0x134] sm:$0xf]
    %v112 = vld [vmem:[#allocation2 + $0x138] sm:$0xff]
    %v113 = vld [vmem:[#allocation2 + $0x140] sm:$0xf]
    %v114 = vld [vmem:[#allocation2 + $0x144] sm:$0xff]
    %v115 = vld [vmem:[#allocation2 + $0x14c] sm:$0xf]
    %v116 = vld [vmem:[#allocation2 + $0x150] sm:$0xff]
    %v117 = vld [vmem:[#allocation2 + $0x158] sm:$0xf]
    %v118 = vld [vmem:[#allocation2 + $0x15c] sm:$0xff]
    %v119 = vld [vmem:[#allocation2 + $0x164] sm:$0xf]
    %v120 = vld [vmem:[#allocation2 + $0x168] sm:$0xff]
    %v121 = vld [vmem:[#allocation2 + $0x170] sm:$0xf]
    %v122 = vld [vmem:[#allocation2 + $0x174] sm:$0xff]
    %v123 = vld [vmem:[#allocation2 + $0x17c] sm:$0xf]
    %v124 = vld [vmem:[#allocation2 + $0x180] sm:$0xff]
    %v125 = vld [vmem:[#allocation2 + $0x188] sm:$0xf]
    %v126 = vld [vmem:[#allocation2 + $0x18c] sm:$0xff]
    %v127 = vld [vmem:[#allocation2 + $0x194] sm:$0xf]
    %v128 = vld [vmem:[#allocation2 + $0x198] sm:$0xff]
    %v129 = vld [vmem:[#allocation2 + $0x1a0] sm:$0xf]
    %v130 = vld [vmem:[#allocation2 + $0x1a4] sm:$0xff]
    %v131 = vld [vmem:[#allocation2 + $0x1ac] sm:$0xf]
    %v132 = vld [vmem:[#allocation2 + $0x1b0] sm:$0xff]
    %v133 = vld [vmem:[#allocation2 + $0x1b8] sm:$0xf]
    %v134 = vld [vmem:[#allocation2 + $0x1bc] sm:$0xff]
    %v135 = vld [vmem:[#allocation2 + $0x1c4] sm:$0xf]
    %v136 = vld [vmem:[#allocation2 + $0x1c8] sm:$0xff]
    %v137 = vld [vmem:[#allocation2 + $0x1d0] sm:$0xf]
    %v138 = vld [vmem:[#allocation2 + $0x1d4] sm:$0xff]
    %v139 = vld [vmem:[#allocation2 + $0x1dc] sm:$0xf]
    %v140 = vld [vmem:[#allocation2 + $0x1e0] sm:$0xff]
    %v141 = vld [vmem:[#allocation2 + $0x1e8] sm:$0xf]
    %v142 = vld [vmem:[#allocation2 + $0x1ec] sm:$0xff]
    %v143 = vld [vmem:[#allocation2 + $0x1f4] sm:$0xf]
    %v144 = vld [vmem:[#allocation2 + $0x1f8] sm:$0xff]
    %v145 = vld [vmem:[#allocation2 + $0x200] sm:$0xf]
    %v146 = vld [vmem:[#allocation2 + $0x204] sm:$0xff]
    %v147 = vld [vmem:[#allocation2 + $0x20c] sm:$0xf]
    %v148 = vld [vmem:[#allocation2 + $0x210] sm:$0xff]
    %v149 = vld [vmem:[#allocation2 + $0x218] sm:$0xf]
    %v150 = vld [vmem:[#allocation2 + $0x21c] sm:$0xff]
    %v151 = vld [vmem:[#allocation2 + $0x224] sm:$0xf]
    %v152 = vld [vmem:[#allocation2 + $0x228] sm:$0xff]
    %v153 = vld [vmem:[#allocation2 + $0x230] sm:$0xf]
    %v154 = vld [vmem:[#allocation2 + $0x234] sm:$0xff]
    %v155 = vld [vmem:[#allocation2 + $0x23c] sm:$0xf]
    %v156 = vld [vmem:[#allocation2 + $0x240] sm:$0xff]
    %v157 = vld [vmem:[#allocation2 + $0x248] sm:$0xf]
    %v158 = vld [vmem:[#allocation2 + $0x24c] sm:$0xff]
    %v159 = vld [vmem:[#allocation2 + $0x254] sm:$0xf]
    %v160 = vld [vmem:[#allocation2 + $0x258] sm:$0xff]
    %v161 = vld [vmem:[#allocation2 + $0x260] sm:$0xf]
    %v162 = vld [vmem:[#allocation2 + $0x264] sm:$0xff]
    %v163 = vld [vmem:[#allocation2 + $0x26c] sm:$0xf]
    %v164 = vld [vmem:[#allocation2 + $0x270] sm:$0xff]
    %v165 = vld [vmem:[#allocation2 + $0x278] sm:$0xf]
    %v166 = vld [vmem:[#allocation2 + $0x27c] sm:$0xff]
    %v167 = vld [vmem:[#allocation2 + $0x284] sm:$0xf]
    %v168 = vld [vmem:[#allocation2 + $0x288] sm:$0xff]
    %v169 = vld [vmem:[#allocation2 + $0x290] sm:$0xf]
    %v170 = vld [vmem:[#allocation2 + $0x294] sm:$0xff]
    %v171 = vld [vmem:[#allocation2 + $0x29c] sm:$0xf]
    %v172 = vld [vmem:[#allocation2 + $0x2a0] sm:$0xff]
    %v173 = vld [vmem:[#allocation2 + $0x2a8] sm:$0xf]
    %v174 = vld [vmem:[#allocation2 + $0x2ac] sm:$0xff]
    %v175 = vld [vmem:[#allocation2 + $0x2b4] sm:$0xf]
    %v176 = vld [vmem:[#allocation2 + $0x2b8] sm:$0xff]
    %v177 = vld [vmem:[#allocation2 + $0x2c0] sm:$0xf]
    %v178 = vld [vmem:[#allocation2 + $0x2c4] sm:$0xff]
    %v179 = vld [vmem:[#allocation2 + $0x2cc] sm:$0xf]
    %v180 = vld [vmem:[#allocation2 + $0x2d0] sm:$0xff]
    %v181 = vld [vmem:[#allocation2 + $0x2d8] sm:$0xf]
    %v182 = vld [vmem:[#allocation2 + $0x2dc] sm:$0xff]
    %v183 = vld [vmem:[#allocation2 + $0x2e4] sm:$0xf]
    %v184 = vld [vmem:[#allocation2 + $0x2e8] sm:$0xff]
    %v185 = vld [vmem:[#allocation2 + $0x2f0] sm:$0xf]
    %v186 = vld [vmem:[#allocation2 + $0x2f4] sm:$0xff]
    %v187 = vld [vmem:[#allocation2 + $0x2fc] sm:$0xf]
    %v188 = vld [vmem:[#allocation2 + $0x300] sm:$0xff]
    %v189 = vld [vmem:[#allocation2 + $0x308] sm:$0xf]
    %v190 = vld [vmem:[#allocation2 + $0x30c] sm:$0xff]
    %v191 = vld [vmem:[#allocation2 + $0x314] sm:$0xf]
    %v192 = vld [vmem:[#allocation2 + $0x318] sm:$0xff]
    %v193 = vld [vmem:[#allocation2 + $0x320] sm:$0xf]
    %v194 = vld [vmem:[#allocation2 + $0x324] sm:$0xff]
    %v195 = vld [vmem:[#allocation2 + $0x32c] sm:$0xf]
    %v196 = vld [vmem:[#allocation2 + $0x330] sm:$0xff]
    %v197 = vld [vmem:[#allocation2 + $0x348] sm:$0xf]
    %v198 = vld [vmem:[#allocation2 + $0x360] sm:$0xf]
    %v199 = vld [vmem:[#allocation2 + $0x378] sm:$0xf]
    %v200 = vld [vmem:[#allocation2 + $0x384] sm:$0xf]
    %v201 = vld [vmem:[#allocation2 + $0x390] sm:$0xf]
    %v202 = vld [vmem:[#allocation2 + $0x39c] sm:$0xf]
    %v203 = vld [vmem:[#allocation2 + $0x3a8] sm:$0xf]
    %205 = vset.pattern.permute.xlu0 0
    %206 = vperm.xlu0 %205, %v49
    %v207 = vpop.permute.xlu0 %206
    %v209 = vmul.f32 %v207, %v61
    %v210 = vand.u32 2147483647, %v209
    %vm211 = vcmp.le.f32.partialorder %v210, 0.7853982
    %vm212 = vcmp.lt.s32.totalorder %v209, 0
    %v213 = vand.u32 %v209, 2139095040
    %v214 = vshrl.u32 %v213, 23
    %v215 = vsub.s32 %v214, 127
    %v216 = vand.u32 2147483647, %v209
    %v217 = vand.u32 %v216, 8388607
    %v218 = vor.u32 %v217, 8388608
    %v219 = vsub.s32 0, %v218
    %v220 = vadd.s32 %v215, 1
    %vm221 = vcmp.gt.s32.totalorder %v220, 0
    %v222 = vsel %vm221, %v220, 0
    %v223 = vshrl.u32 %v222, 5
    %v224 = vand.u32 %v222, 31
    %v225 = vsub.s32 32, %v224
    %v226 = vshrl.u32 683565275, %v225
    %v227 = vshll.u32 683565275, %v224
    %v228 = vshrl.u32 2475754826, %v225
    %v229 = vor.u32 %v227, %v228
    %v230 = vshll.u32 2475754826, %v224
    %v231 = vshrl.u32 2131351028, %v225
    %v232 = vor.u32 %v230, %v231
    %v233 = vshll.u32 2131351028, %v224
    %v234 = vshrl.u32 2102212464, %v225
    %v235 = vor.u32 %v233, %v234
    %v236 = vshll.u32 2102212464, %v224
    %v237 = vshrl.u32 920167782, %v225
    %v238 = vor.u32 %v236, %v237
    %v239 = vshll.u32 920167782, %v224
    %v240 = vshrl.u32 1326507024, %v225
    %v241 = vor.u32 %v239, %v240
    %vm242 = vcmp.lt.s32.totalorder %v223, 1
    %vm243 = vcmp.lt.s32.totalorder %v223, 2
    %vm244 = vcmp.lt.s32.totalorder %v223, 3
    %vm245 = vcmp.lt.s32.totalorder %v223, 4
    %v246 = vsel %vm242, %v226, %v229
    %v247 = vsel %vm245, %v235, 2102212464
    %v248 = vsel %vm244, %v232, %v247
    %v249 = vsel %vm243, %v246, %v248
    %v250 = vsel %vm242, %v229, %v232
    %v251 = vsel %vm245, %v238, 920167782
    %v252 = vsel %vm244, %v235, %v251
    %v253 = vsel %vm243, %v250, %v252
    %v254 = vsel %vm242, %v232, %v235
    %v255 = vsel %vm245, %v241, 1326507024
    %v256 = vsel %vm244, %v238, %v255
    %v257 = vsel %vm243, %v254, %v256
    %v258 = vshll.u32 %v218, 8
    %v259 = vmul.u32.u64.compose %v258, %v257
    %v260 = vextract.low.u32 %v259
    %v261 = vextract.high.u32 %v259
    %v262 = vmul.u32.u64.compose %v258, %v253
    %v263 = vextract.low.u32 %v262
    %v264 = vextract.high.u32 %v262
    %v265 = vmul.u32 %v258, %v249
    %v266 = vadd.s32 %v261, %v263
    %vm267 = vc.u32 %v261, %v263
    %v268 = vadd.s32 %v264, 1
    %v269 = vsel %vm267, %v268, %v264
    %v270 = vadd.s32 %v265, %v269
    %v271 = vadd.s32 %v270, 536870912
    %v272 = vshrl.u32 %v271, 30
    %v273 = vshll.u32 %v272, 30
    %v274 = vsub.s32 %v270, %v273
    %vm275 = vcmp.lt.s32.totalorder %v274, 0
    %v276 = vsub.s32 0, %v274
    %v277 = vsel %vm275, %v276, %v274
    %v278 = vclz %v277
    %v279 = vsub.s32 %v278, 2
    %vm280 = vcmp.gt.s32.totalorder 0, %v279
    %v281 = vsel %vm280, 0, %v279
    %v282 = vsub.s32 32, %v281
    %v283 = vshll.u32 %v274, %v281
    %v284 = vshrl.u32 %v266, %v282
    %v285 = vor.u32 %v283, %v284
    %v286 = vsub.s32 4294967266, %v281
    %v287 = vadd.s32 %v286, 127
    %v288 = vshll.u32 %v287, 23
    %v289 = vor.u32 4788187, %v288
    %v290 = vand.u32 2147483647, %v289
    %v292 = vcvt.s32.f32 %v285
    %v293 = vmul.f32 %v292, %v290
    %v294 = vxor.u32 %v293, 2147483648
    %v295 = vsel %vm212, %v294, %v293
    %v296 = vsub.s32 4, %v272
    %v297 = vsel %vm212, %v296, %v272
    %v298 = vsel %vm211, %v209, %v295
    %v299 = vsel %vm211, 0, %v297
    %v300 = vcosq.f32.pop %v298
    %v301 = vsinq.f32.pop %v298
    %vm302 = vweird.f32 %v209
    %v303 = vadd.s32 %v299, 3
    %v304 = vand.u32 %v303, 3
    %vm305 = vcmp.lt.s32.totalorder %v304, 2
    %vm306 = vcmp.eq.s32.totalorder %v304, 0
    %v307 = vxor.u32 %v301, 2147483648
    %v308 = vsel %vm306, %v300, %v307
    %vm309 = vcmp.eq.s32.totalorder %v304, 2
    %v310 = vxor.u32 %v300, 2147483648
    %v311 = vsel %vm309, %v310, %v301
    %v312 = vsel %vm305, %v308, %v311
    %v313 = vsel %vm302, nan, %v312
    %v314 = vpack.c.bf16 %v313, %v313
    %v315 = vand.u32 2147483647, %v209
    %vm316 = vcmp.le.f32.partialorder %v315, 0.7853982
    %vm317 = vcmp.lt.s32.totalorder %v209, 0
    %v318 = vand.u32 %v209, 2139095040
    %v319 = vshrl.u32 %v318, 23
    %v320 = vsub.s32 %v319, 127
    %v321 = vand.u32 2147483647, %v209
    %v322 = vand.u32 %v321, 8388607
    %v323 = vor.u32 %v322, 8388608
    %v324 = vsub.s32 0, %v323
    %v325 = vadd.s32 %v320, 1
    %vm326 = vcmp.gt.s32.totalorder %v325, 0
    %v327 = vsel %vm326, %v325, 0
    %v328 = vshrl.u32 %v327, 5
    %v329 = vand.u32 %v327, 31
    %v330 = vsub.s32 32, %v329
    %v331 = vshrl.u32 683565275, %v330
    %v332 = vshll.u32 683565275, %v329
    %v333 = vshrl.u32 2475754826, %v330
    %v334 = vor.u32 %v332, %v333
    %v335 = vshll.u32 2475754826, %v329
    %v336 = vshrl.u32 2131351028, %v330
    %v337 = vor.u32 %v335, %v336
    %v338 = vshll.u32 2131351028, %v329
    %v339 = vshrl.u32 2102212464, %v330
    %v340 = vor.u32 %v338, %v339
    %v341 = vshll.u32 2102212464, %v329
    %v342 = vshrl.u32 920167782, %v330
    %v343 = vor.u32 %v341, %v342
    %v344 = vshll.u32 920167782, %v329
    %v345 = vshrl.u32 1326507024, %v330
    %v346 = vor.u32 %v344, %v345
    %vm347 = vcmp.lt.s32.totalorder %v328, 1
    %vm348 = vcmp.lt.s32.totalorder %v328, 2
    %vm349 = vcmp.lt.s32.totalorder %v328, 3
    %vm350 = vcmp.lt.s32.totalorder %v328, 4
    %v351 = vsel %vm347, %v331, %v334
    %v352 = vsel %vm350, %v340, 2102212464
    %v353 = vsel %vm349, %v337, %v352
    %v354 = vsel %vm348, %v351, %v353
    %v355 = vsel %vm347, %v334, %v337
    %v356 = vsel %vm350, %v343, 920167782
    %v357 = vsel %vm349, %v340, %v356
    %v358 = vsel %vm348, %v355, %v357
    %v359 = vsel %vm347, %v337, %v340
    %v360 = vsel %vm350, %v346, 1326507024
    %v361 = vsel %vm349, %v343, %v360
    %v362 = vsel %vm348, %v359, %v361
    %v363 = vshll.u32 %v323, 8
    %v364 = vmul.u32.u64.compose %v363, %v362
    %v365 = vextract.low.u32 %v364
    %v366 = vextract.high.u32 %v364
    %v367 = vmul.u32.u64.compose %v363, %v358
    %v368 = vextract.low.u32 %v367
    %v369 = vextract.high.u32 %v367
    %v370 = vmul.u32 %v363, %v354
    %v371 = vadd.s32 %v366, %v368
    %vm372 = vc.u32 %v366, %v368
    %v373 = vadd.s32 %v369, 1
    %v374 = vsel %vm372, %v373, %v369
    %v375 = vadd.s32 %v370, %v374
    %v376 = vadd.s32 %v375, 536870912
    %v377 = vshrl.u32 %v376, 30
    %v378 = vshll.u32 %v377, 30
    %v379 = vsub.s32 %v375, %v378
    %vm380 = vcmp.lt.s32.totalorder %v379, 0
    %v381 = vsub.s32 0, %v379
    %v382 = vsel %vm380, %v381, %v379
    %v383 = vclz %v382
    %v384 = vsub.s32 %v383, 2
    %vm385 = vcmp.gt.s32.totalorder 0, %v384
    %v386 = vsel %vm385, 0, %v384
    %v387 = vsub.s32 32, %v386
    %v388 = vshll.u32 %v379, %v386
    %v389 = vshrl.u32 %v371, %v387
    %v390 = vor.u32 %v388, %v389
    %v391 = vsub.s32 4294967266, %v386
    %v392 = vadd.s32 %v391, 127
    %v393 = vshll.u32 %v392, 23
    %v394 = vor.u32 4788187, %v393
    %v395 = vand.u32 2147483647, %v394
    %v397 = vcvt.s32.f32 %v390
    %v398 = vmul.f32 %v397, %v395
    %v399 = vxor.u32 %v398, 2147483648
    %v400 = vsel %vm317, %v399, %v398
    %v401 = vsub.s32 4, %v377
    %v402 = vsel %vm317, %v401, %v377
    %v403 = vsel %vm316, %v209, %v400
    %v404 = vsel %vm316, 0, %v402
    %v405 = vcosq.f32.pop %v403
    %v406 = vsinq.f32.pop %v403
    %vm407 = vweird.f32 %v209
    %v408 = vand.u32 %v404, 3
    %vm409 = vcmp.lt.s32.totalorder %v408, 2
    %vm410 = vcmp.eq.s32.totalorder %v408, 0
    %v411 = vxor.u32 %v406, 2147483648
    %v412 = vsel %vm410, %v405, %v411
    %vm413 = vcmp.eq.s32.totalorder %v408, 2
    %v414 = vxor.u32 %v405, 2147483648
    %v415 = vsel %vm413, %v414, %v406
    %v416 = vsel %vm409, %v412, %v415
    %v417 = vsel %vm407, nan, %v416
    %v418 = vpack.c.bf16 %v417, %v417
    %vm419 = vcmask 64512
    %v421 = vsel %vm419, %v418, 0
    %vm423 = vcmask 1043456
    %v425 = vsel %vm423, %v198, 0
    %427 = vmatprep.subr.bf16.mxu0 0
    %428 = vmatpush1.bf16.msra.mxu0 0
    %429 = vmatprep.subr.bf16.mxu0 0
    %430 = vmatpush1.bf16.msra.mxu0 0
    %431 = vmatprep.subr.bf16.mxu0 0
    %432 = vmatpush1.bf16.msra.mxu0 0
    %433 = vmatprep.subr.bf16.mxu0 0
    %434 = vmatpush1.bf16.msra.mxu0 0
    %435 = vmatprep.subr.bf16.mxu0 0
    %436 = vmatpush1.bf16.msra.mxu0 0
    %437 = vmatprep.subr.bf16.mxu0 0
    %438 = vmatpush1.bf16.msra.mxu0 0
    %439 = vmatprep.subr.bf16.mxu0 0
    %440 = vmatpush1.bf16.msra.mxu0 0
    %441 = vmatprep.subr.bf16.mxu0 0
    %442 = vmatpush1.bf16.msra.mxu0 %v425
    %443 = vmatprep.subr.bf16.mxu0 0
    %444 = vmatpush2.bf16.msra.mxu0 0
    %445 = vmatprep.subr.bf16.mxu0 0
    %446 = vmatpush2.bf16.msra.mxu0 0
    %447 = vmatprep.subr.bf16.mxu0 0
    %448 = vmatpush2.bf16.msra.mxu0 0
    %449 = vmatprep.subr.bf16.mxu0 0
    %450 = vmatpush2.bf16.msra.mxu0 0
    %451 = vmatprep.subr.bf16.mxu0 0
    %452 = vmatpush2.bf16.msra.mxu0 0
    %453 = vmatprep.subr.bf16.mxu0 0
    %454 = vmatpush2.bf16.msra.mxu0 0
    %455 = vmatprep.subr.bf16.mxu0 0
    %456 = vmatpush2.bf16.msra.mxu0 0
    %457 = vmatprep.subr.bf16.mxu0 0
    %458 = vmatpush2.bf16.msra.mxu0 0
    %459 = vmatprep.mubr.bf16.mxu0 0
    %460 = vmatmul.mubr.bf16.gmra.mxu0 %v421
    %v461 = vpop.f32.mrf.mxu0
    %v462 = vadd.f32 0.0, %v461
    %v463 = vpop.f32.mrf.mxu0
    %v464 = vpop.f32.mrf.mxu0
    %v465 = vpop.f32.mrf.mxu0
    %466 = vdwg.mxu0
    %v468 = vsel %vm419, %v314, 0
    %v471 = vsel %vm423, %v197, 0
    %473 = vmatprep.subr.bf16.mxu0 0
    %474 = vmatpush1.bf16.msra.mxu0 0
    %475 = vmatprep.subr.bf16.mxu0 0
    %476 = vmatpush1.bf16.msra.mxu0 0
    %477 = vmatprep.subr.bf16.mxu0 0
    %478 = vmatpush1.bf16.msra.mxu0 0
    %479 = vmatprep.subr.bf16.mxu0 0
    %480 = vmatpush1.bf16.msra.mxu0 0
    %481 = vmatprep.subr.bf16.mxu0 0
    %482 = vmatpush1.bf16.msra.mxu0 0
    %483 = vmatprep.subr.bf16.mxu0 0
    %484 = vmatpush1.bf16.msra.mxu0 0
    %485 = vmatprep.subr.bf16.mxu0 0
    %486 = vmatpush1.bf16.msra.mxu0 0
    %487 = vmatprep.subr.bf16.mxu0 0
    %488 = vmatpush1.bf16.msra.mxu0 %v471
    %489 = vmatprep.subr.bf16.mxu0 0
    %490 = vmatpush2.bf16.msra.mxu0 0
    %491 = vmatprep.subr.bf16.mxu0 0
    %492 = vmatpush2.bf16.msra.mxu0 0
    %493 = vmatprep.subr.bf16.mxu0 0
    %494 = vmatpush2.bf16.msra.mxu0 0
    %495 = vmatprep.subr.bf16.mxu0 0
    %496 = vmatpush2.bf16.msra.mxu0 0
    %497 = vmatprep.subr.bf16.mxu0 0
    %498 = vmatpush2.bf16.msra.mxu0 0
    %499 = vmatprep.subr.bf16.mxu0 0
    %500 = vmatpush2.bf16.msra.mxu0 0
    %501 = vmatprep.subr.bf16.mxu0 0
    %502 = vmatpush2.bf16.msra.mxu0 0
    %503 = vmatprep.subr.bf16.mxu0 0
    %504 = vmatpush2.bf16.msra.mxu0 0
    %505 = vmatprep.mubr.bf16.mxu0 0
    %506 = vmatmul.mubr.bf16.gmra.mxu0 %v468
    %v507 = vpop.f32.mrf.mxu0
    %v508 = vadd.f32 %v462, %v507
    %v509 = vpop.f32.mrf.mxu0
    %v510 = vpop.f32.mrf.mxu0
    %v511 = vpop.f32.mrf.mxu0
    %512 = vdwg.mxu0
    %v513 = vadd.f32 %v508, %v58
    %v514 = vmax.f32 %v513, 0.0
    %v515 = vpack.c.bf16 %v514, %v514
    %v520 = vunpack.c.l.b16 %v199
    %v521 = vunpack.c.l.b16 %v200
    %v522 = vunpack.c.l.b16 %v201
    %v523 = vunpack.c.l.b16 %v202
    %v524 = vpack.c.b16 %v521, %v520
    %v525 = vpack.c.b16 %v523, %v522
    %vm528 = vcmask 261120
    %v530 = vsel %vm528, %v515, 0
    %532 = vmatprep.subr.bf16.mxu0 0
    %533 = vmatpush1.bf16.msra.mxu0 0
    %534 = vmatprep.subr.bf16.mxu0 0
    %535 = vmatpush1.bf16.msra.mxu0 0
    %536 = vmatprep.subr.bf16.mxu0 0
    %537 = vmatpush1.bf16.msra.mxu0 0
    %538 = vmatprep.subr.bf16.mxu0 0
    %539 = vmatpush1.bf16.msra.mxu0 0
    %540 = vmatprep.subr.bf16.mxu0 0
    %541 = vmatpush1.bf16.msra.mxu0 0
    %542 = vmatprep.subr.bf16.mxu0 0
    %543 = vmatpush1.bf16.msra.mxu0 0
    %544 = vmatprep.subr.bf16.mxu0 0
    %545 = vmatpush1.bf16.msra.mxu0 %v525
    %546 = vmatprep.subr.bf16.mxu0 0
    %547 = vmatpush1.bf16.msra.mxu0 %v524
    %548 = vmatprep.subr.bf16.mxu0 0
    %549 = vmatpush2.bf16.msra.mxu0 0
    %550 = vmatprep.subr.bf16.mxu0 0
    %551 = vmatpush2.bf16.msra.mxu0 0
    %552 = vmatprep.subr.bf16.mxu0 0
    %553 = vmatpush2.bf16.msra.mxu0 0
    %554 = vmatprep.subr.bf16.mxu0 0
    %555 = vmatpush2.bf16.msra.mxu0 0
    %556 = vmatprep.subr.bf16.mxu0 0
    %557 = vmatpush2.bf16.msra.mxu0 0
    %558 = vmatprep.subr.bf16.mxu0 0
    %559 = vmatpush2.bf16.msra.mxu0 0
    %560 = vmatprep.subr.bf16.mxu0 0
    %561 = vmatpush2.bf16.msra.mxu0 0
    %562 = vmatprep.subr.bf16.mxu0 0
    %563 = vmatpush2.bf16.msra.mxu0 0
    %564 = vmatprep.mubr.bf16.mxu0 0
    %565 = vmatmul.mubr.bf16.gmra.mxu0 %v530
    %v566 = vpop.f32.mrf.mxu0
    %v567 = vadd.f32 %v59, %v566
    %v568 = vpop.f32.mrf.mxu0
    %v569 = vpop.f32.mrf.mxu0
    %v570 = vpop.f32.mrf.mxu0
    %571 = vdwg.mxu0
    %v572 = vpack.c.bf16 %v50, %v50
    %v574 = vlaneseq
    %v575 = vshrl.u32 %v574, 7
    %v576 = vsub.s32 0, %v575
    %v577 = vrot.slane %v57, %v576
    %v578 = vlaneseq
    %v579 = vshrl.u32 %v578, 7
    %v580 = vsub.s32 1, %v579
    %v581 = vrot.slane %v57, %v580
    %v585 = vunpack.c.l.b16 %v196
    %v586 = vunpack.c.h.b16 %v196
    %v587 = vpack.c.b16 %v585, %v585
    %v588 = vpack.c.b16 %v586, %v586
    %v590 = vsel %vm419, %v572, 0
    %v593 = vsel %vm423, %v587, 0
    %v596 = vsel %vm423, %v588, 0
    %598 = vmatprep.subr.bf16.mxu0 0
    %599 = vmatpush1.bf16.msra.mxu0 0
    %600 = vmatprep.subr.bf16.mxu0 0
    %601 = vmatpush1.bf16.msra.mxu0 0
    %602 = vmatprep.subr.bf16.mxu0 0
    %603 = vmatpush1.bf16.msra.mxu0 0
    %604 = vmatprep.subr.bf16.mxu0 0
    %605 = vmatpush1.bf16.msra.mxu0 0
    %606 = vmatprep.subr.bf16.mxu0 0
    %607 = vmatpush1.bf16.msra.mxu0 0
    %608 = vmatprep.subr.bf16.mxu0 0
    %609 = vmatpush1.bf16.msra.mxu0 0
    %610 = vmatprep.subr.bf16.mxu0 0
    %611 = vmatpush1.bf16.msra.mxu0 0
    %612 = vmatprep.subr.bf16.mxu0 %v596
    %613 = vmatpush1.bf16.msra.mxu0 %v593
    %614 = vmatprep.subr.bf16.mxu0 0
    %615 = vmatpush2.bf16.msra.mxu0 0
    %616 = vmatprep.subr.bf16.mxu0 0
    %617 = vmatpush2.bf16.msra.mxu0 0
    %618 = vmatprep.subr.bf16.mxu0 0
    %619 = vmatpush2.bf16.msra.mxu0 0
    %620 = vmatprep.subr.bf16.mxu0 0
    %621 = vmatpush2.bf16.msra.mxu0 0
    %622 = vmatprep.subr.bf16.mxu0 0
    %623 = vmatpush2.bf16.msra.mxu0 0
    %624 = vmatprep.subr.bf16.mxu0 0
    %625 = vmatpush2.bf16.msra.mxu0 0
    %626 = vmatprep.subr.bf16.mxu0 0
    %627 = vmatpush2.bf16.msra.mxu0 0
    %628 = vmatprep.subr.bf16.mxu0 0
    %629 = vmatpush2.bf16.msra.mxu0 0
    %630 = vmatprep.mubr.bf16.mxu0 0
    %631 = vmatmul.mubr.bf16.gmra.mxu0 %v590
    %v632 = vpop.f32.mrf.mxu0
    %v633 = vadd.f32 %v577, %v632
    %v634 = vpop.f32.mrf.mxu0
    %v635 = vadd.f32 %v581, %v634
    %v636 = vpop.f32.mrf.mxu0
    %v637 = vpop.f32.mrf.mxu0
    %638 = vdwg.mxu0
    %v639 = vmax.f32 %v633, 0.0
    %v640 = vmax.f32 %v635, 0.0
    %v641 = vpack.c.bf16 %v48, %v48
    %v642 = vpack.c.bf16 %v567, %v567
    %v647 = vunpack.c.l.b16 %v64
    %v648 = vunpack.c.h.b16 %v64
    %v649 = vunpack.c.l.b16 %v65
    %v650 = vunpack.c.l.b16 %v66
    %v651 = vunpack.c.h.b16 %v66
    %v652 = vunpack.c.l.b16 %v67
    %v653 = vpack.c.b16 %v650, %v647
    %v654 = vpack.c.b16 %v651, %v648
    %v655 = vpack.c.b16 %v652, %v649
    %vm659 = vcmask 130048
    %v661 = vsel %vm659, %v642, 0
    %663 = vmatprep.subr.bf16.mxu0 0
    %664 = vmatpush1.bf16.msra.mxu0 0
    %665 = vmatprep.subr.bf16.mxu0 0
    %666 = vmatpush1.bf16.msra.mxu0 0
    %667 = vmatprep.subr.bf16.mxu0 0
    %668 = vmatpush1.bf16.msra.mxu0 0
    %669 = vmatprep.subr.bf16.mxu0 0
    %670 = vmatpush1.bf16.msra.mxu0 0
    %671 = vmatprep.subr.bf16.mxu0 0
    %672 = vmatpush1.bf16.msra.mxu0 0
    %673 = vmatprep.subr.bf16.mxu0 0
    %674 = vmatpush1.bf16.msra.mxu0 0
    %675 = vmatprep.subr.bf16.mxu0 0
    %676 = vmatpush1.bf16.msra.mxu0 0
    %677 = vmatprep.subr.bf16.mxu0 %v654
    %678 = vmatpush1.bf16.msra.mxu0 %v653
    %679 = vmatprep.subr.bf16.mxu0 0
    %680 = vmatpush2.bf16.msra.mxu0 0
    %681 = vmatprep.subr.bf16.mxu0 0
    %682 = vmatpush2.bf16.msra.mxu0 0
    %683 = vmatprep.subr.bf16.mxu0 0
    %684 = vmatpush2.bf16.msra.mxu0 0
    %685 = vmatprep.subr.bf16.mxu0 0
    %686 = vmatpush2.bf16.msra.mxu0 0
    %687 = vmatprep.subr.bf16.mxu0 0
    %688 = vmatpush2.bf16.msra.mxu0 0
    %689 = vmatprep.subr.bf16.mxu0 0
    %690 = vmatpush2.bf16.msra.mxu0 0
    %691 = vmatprep.subr.bf16.mxu0 0
    %692 = vmatpush2.bf16.msra.mxu0 0
    %693 = vmatprep.subr.bf16.mxu0 0
    %694 = vmatpush2.bf16.msra.mxu0 0
    %695 = vmatprep.mubr.bf16.mxu0 0
    %696 = vmatmul.mubr.bf16.gmra.mxu0 %v661
    %v697 = vpop.f32.mrf.mxu0
    %v698 = vadd.f32 0.0, %v697
    %v699 = vpop.f32.mrf.mxu0
    %v700 = vadd.f32 0.0, %v699
    %v701 = vpop.f32.mrf.mxu0
    %v702 = vpop.f32.mrf.mxu0
    %703 = vdwg.mxu0
    %704 = vmatprep.subr.bf16.mxu0 0
    %705 = vmatpush1.bf16.msra.mxu0 0
    %706 = vmatprep.subr.bf16.mxu0 0
    %707 = vmatpush1.bf16.msra.mxu0 0
    %708 = vmatprep.subr.bf16.mxu0 0
    %709 = vmatpush1.bf16.msra.mxu0 0
    %710 = vmatprep.subr.bf16.mxu0 0
    %711 = vmatpush1.bf16.msra.mxu0 0
    %712 = vmatprep.subr.bf16.mxu0 0
    %713 = vmatpush1.bf16.msra.mxu0 0
    %714 = vmatprep.subr.bf16.mxu0 0
    %715 = vmatpush1.bf16.msra.mxu0 0
    %716 = vmatprep.subr.bf16.mxu0 0
    %717 = vmatpush1.bf16.msra.mxu0 0
    %718 = vmatprep.subr.bf16.mxu0 0
    %719 = vmatpush1.bf16.msra.mxu0 %v655
    %720 = vmatprep.subr.bf16.mxu0 0
    %721 = vmatpush2.bf16.msra.mxu0 0
    %722 = vmatprep.subr.bf16.mxu0 0
    %723 = vmatpush2.bf16.msra.mxu0 0
    %724 = vmatprep.subr.bf16.mxu0 0
    %725 = vmatpush2.bf16.msra.mxu0 0
    %726 = vmatprep.subr.bf16.mxu0 0
    %727 = vmatpush2.bf16.msra.mxu0 0
    %728 = vmatprep.subr.bf16.mxu0 0
    %729 = vmatpush2.bf16.msra.mxu0 0
    %730 = vmatprep.subr.bf16.mxu0 0
    %731 = vmatpush2.bf16.msra.mxu0 0
    %732 = vmatprep.subr.bf16.mxu0 0
    %733 = vmatpush2.bf16.msra.mxu0 0
    %734 = vmatprep.subr.bf16.mxu0 0
    %735 = vmatpush2.bf16.msra.mxu0 0
    %736 = vmatprep.mubr.bf16.mxu0 0
    %737 = vmatmul.mubr.bf16.gmra.mxu0 %v661
    %v738 = vpop.f32.mrf.mxu0
    %v739 = vadd.f32 0.0, %v738
    %v740 = vpop.f32.mrf.mxu0
    %v741 = vpop.f32.mrf.mxu0
    %v742 = vpop.f32.mrf.mxu0
    %743 = vdwg.mxu0
    %v746 = vunpack.c.l.b16 %v62
    %v747 = vunpack.c.h.b16 %v62
    %v748 = vunpack.c.l.b16 %v63
    %v749 = vpack.c.b16 %v746, %v746
    %v750 = vpack.c.b16 %v747, %v747
    %v751 = vpack.c.b16 %v748, %v748
    %vm752 = vcmask 31744
    %v754 = vsel %vm752, %v641, 0
    %vm756 = vcmask 1041408
    %v758 = vsel %vm756, %v749, 0
    %v761 = vsel %vm756, %v750, 0
    %v764 = vsel %vm756, %v751, 0
    %766 = vmatprep.subr.bf16.mxu0 0
    %767 = vmatpush1.bf16.msra.mxu0 0
    %768 = vmatprep.subr.bf16.mxu0 0
    %769 = vmatpush1.bf16.msra.mxu0 0
    %770 = vmatprep.subr.bf16.mxu0 0
    %771 = vmatpush1.bf16.msra.mxu0 0
    %772 = vmatprep.subr.bf16.mxu0 0
    %773 = vmatpush1.bf16.msra.mxu0 0
    %774 = vmatprep.subr.bf16.mxu0 0
    %775 = vmatpush1.bf16.msra.mxu0 0
    %776 = vmatprep.subr.bf16.mxu0 0
    %777 = vmatpush1.bf16.msra.mxu0 0
    %778 = vmatprep.subr.bf16.mxu0 0
    %779 = vmatpush1.bf16.msra.mxu0 0
    %780 = vmatprep.subr.bf16.mxu0 %v761
    %781 = vmatpush1.bf16.msra.mxu0 %v758
    %782 = vmatprep.subr.bf16.mxu0 0
    %783 = vmatpush2.bf16.msra.mxu0 0
    %784 = vmatprep.subr.bf16.mxu0 0
    %785 = vmatpush2.bf16.msra.mxu0 0
    %786 = vmatprep.subr.bf16.mxu0 0
    %787 = vmatpush2.bf16.msra.mxu0 0
    %788 = vmatprep.subr.bf16.mxu0 0
    %789 = vmatpush2.bf16.msra.mxu0 0
    %790 = vmatprep.subr.bf16.mxu0 0
    %791 = vmatpush2.bf16.msra.mxu0 0
    %792 = vmatprep.subr.bf16.mxu0 0
    %793 = vmatpush2.bf16.msra.mxu0 0
    %794 = vmatprep.subr.bf16.mxu0 0
    %795 = vmatpush2.bf16.msra.mxu0 0
    %796 = vmatprep.subr.bf16.mxu0 0
    %797 = vmatpush2.bf16.msra.mxu0 0
    %798 = vmatprep.mubr.bf16.mxu0 0
    %799 = vmatmul.mubr.bf16.gmra.mxu0 %v754
    %v800 = vpop.f32.mrf.mxu0
    %v801 = vadd.f32 %v698, %v800
    %v802 = vpop.f32.mrf.mxu0
    %v803 = vadd.f32 %v700, %v802
    %v804 = vpop.f32.mrf.mxu0
    %v805 = vpop.f32.mrf.mxu0
    %806 = vdwg.mxu0
    %807 = vmatprep.subr.bf16.mxu0 0
    %808 = vmatpush1.bf16.msra.mxu0 0
    %809 = vmatprep.subr.bf16.mxu0 0
    %810 = vmatpush1.bf16.msra.mxu0 0
    %811 = vmatprep.subr.bf16.mxu0 0
    %812 = vmatpush1.bf16.msra.mxu0 0
    %813 = vmatprep.subr.bf16.mxu0 0
    %814 = vmatpush1.bf16.msra.mxu0 0
    %815 = vmatprep.subr.bf16.mxu0 0
    %816 = vmatpush1.bf16.msra.mxu0 0
    %817 = vmatprep.subr.bf16.mxu0 0
    %818 = vmatpush1.bf16.msra.mxu0 0
    %819 = vmatprep.subr.bf16.mxu0 0
    %820 = vmatpush1.bf16.msra.mxu0 0
    %821 = vmatprep.subr.bf16.mxu0 0
    %822 = vmatpush1.bf16.msra.mxu0 %v764
    %823 = vmatprep.subr.bf16.mxu0 0
    %824 = vmatpush2.bf16.msra.mxu0 0
    %825 = vmatprep.subr.bf16.mxu0 0
    %826 = vmatpush2.bf16.msra.mxu0 0
    %827 = vmatprep.subr.bf16.mxu0 0
    %828 = vmatpush2.bf16.msra.mxu0 0
    %829 = vmatprep.subr.bf16.mxu0 0
    %830 = vmatpush2.bf16.msra.mxu0 0
    %831 = vmatprep.subr.bf16.mxu0 0
    %832 = vmatpush2.bf16.msra.mxu0 0
    %833 = vmatprep.subr.bf16.mxu0 0
    %834 = vmatpush2.bf16.msra.mxu0 0
    %835 = vmatprep.subr.bf16.mxu0 0
    %836 = vmatpush2.bf16.msra.mxu0 0
    %837 = vmatprep.subr.bf16.mxu0 0
    %838 = vmatpush2.bf16.msra.mxu0 0
    %839 = vmatprep.mubr.bf16.mxu0 0
    %840 = vmatmul.mubr.bf16.gmra.mxu0 %v754
    %v841 = vpop.f32.mrf.mxu0
    %v842 = vadd.f32 %v739, %v841
    %v843 = vpop.f32.mrf.mxu0
    %v844 = vpop.f32.mrf.mxu0
    %v845 = vpop.f32.mrf.mxu0
    %846 = vdwg.mxu0
    %v847 = vpack.c.bf16 %v639, %v639
    %v848 = vpack.c.bf16 %v640, %v640
    %v913 = vunpack.c.l.b16 %v68
    %v914 = vunpack.c.h.b16 %v68
    %v915 = vunpack.c.l.b16 %v69
    %v916 = vunpack.c.l.b16 %v70
    %v917 = vunpack.c.h.b16 %v70
    %v918 = vunpack.c.l.b16 %v71
    %v919 = vunpack.c.l.b16 %v72
    %v920 = vunpack.c.h.b16 %v72
    %v921 = vunpack.c.l.b16 %v73
    %v922 = vunpack.c.l.b16 %v74
    %v923 = vunpack.c.h.b16 %v74
    %v924 = vunpack.c.l.b16 %v75
    %v925 = vunpack.c.l.b16 %v76
    %v926 = vunpack.c.h.b16 %v76
    %v927 = vunpack.c.l.b16 %v77
    %v928 = vunpack.c.l.b16 %v78
    %v929 = vunpack.c.h.b16 %v78
    %v930 = vunpack.c.l.b16 %v79
    %v931 = vunpack.c.l.b16 %v80
    %v932 = vunpack.c.h.b16 %v80
    %v933 = vunpack.c.l.b16 %v81
    %v934 = vunpack.c.l.b16 %v82
    %v935 = vunpack.c.h.b16 %v82
    %v936 = vunpack.c.l.b16 %v83
    %v937 = vunpack.c.l.b16 %v84
    %v938 = vunpack.c.h.b16 %v84
    %v939 = vunpack.c.l.b16 %v85
    %v940 = vunpack.c.l.b16 %v86
    %v941 = vunpack.c.h.b16 %v86
    %v942 = vunpack.c.l.b16 %v87
    %v943 = vunpack.c.l.b16 %v88
    %v944 = vunpack.c.h.b16 %v88
    %v945 = vunpack.c.l.b16 %v89
    %v946 = vunpack.c.l.b16 %v90
    %v947 = vunpack.c.h.b16 %v90
    %v948 = vunpack.c.l.b16 %v91
    %v949 = vunpack.c.l.b16 %v92
    %v950 = vunpack.c.h.b16 %v92
    %v951 = vunpack.c.l.b16 %v93
    %v952 = vunpack.c.l.b16 %v94
    %v953 = vunpack.c.h.b16 %v94
    %v954 = vunpack.c.l.b16 %v95
    %v955 = vunpack.c.l.b16 %v96
    %v956 = vunpack.c.h.b16 %v96
    %v957 = vunpack.c.l.b16 %v97
    %v958 = vunpack.c.l.b16 %v98
    %v959 = vunpack.c.h.b16 %v98
    %v960 = vunpack.c.l.b16 %v99
    %v961 = vunpack.c.l.b16 %v100
    %v962 = vunpack.c.h.b16 %v100
    %v963 = vunpack.c.l.b16 %v101
    %v964 = vunpack.c.l.b16 %v102
    %v965 = vunpack.c.h.b16 %v102
    %v966 = vunpack.c.l.b16 %v103
    %v967 = vunpack.c.l.b16 %v104
    %v968 = vunpack.c.h.b16 %v104
    %v969 = vunpack.c.l.b16 %v105
    %v970 = vunpack.c.l.b16 %v106
    %v971 = vunpack.c.h.b16 %v106
    %v972 = vunpack.c.l.b16 %v107
    %v973 = vunpack.c.l.b16 %v108
    %v974 = vunpack.c.h.b16 %v108
    %v975 = vunpack.c.l.b16 %v109
    %v976 = vunpack.c.l.b16 %v110
    %v977 = vunpack.c.h.b16 %v110
    %v978 = vunpack.c.l.b16 %v111
    %v979 = vunpack.c.l.b16 %v112
    %v980 = vunpack.c.h.b16 %v112
    %v981 = vunpack.c.l.b16 %v113
    %v982 = vunpack.c.l.b16 %v114
    %v983 = vunpack.c.h.b16 %v114
    %v984 = vunpack.c.l.b16 %v115
    %v985 = vunpack.c.l.b16 %v116
    %v986 = vunpack.c.h.b16 %v116
    %v987 = vunpack.c.l.b16 %v117
    %v988 = vunpack.c.l.b16 %v118
    %v989 = vunpack.c.h.b16 %v118
    %v990 = vunpack.c.l.b16 %v119
    %v991 = vunpack.c.l.b16 %v120
    %v992 = vunpack.c.h.b16 %v120
    %v993 = vunpack.c.l.b16 %v121
    %v994 = vunpack.c.l.b16 %v122
    %v995 = vunpack.c.h.b16 %v122
    %v996 = vunpack.c.l.b16 %v123
    %v997 = vunpack.c.l.b16 %v124
    %v998 = vunpack.c.h.b16 %v124
    %v999 = vunpack.c.l.b16 %v125
    %v1000 = vunpack.c.l.b16 %v126
    %v1001 = vunpack.c.h.b16 %v126
    %v1002 = vunpack.c.l.b16 %v127
    %v1003 = vunpack.c.l.b16 %v128
    %v1004 = vunpack.c.h.b16 %v128
    %v1005 = vunpack.c.l.b16 %v129
    %v1006 = vunpack.c.l.b16 %v130
    %v1007 = vunpack.c.h.b16 %v130
    %v1008 = vunpack.c.l.b16 %v131
    %v1009 = vpack.c.b16 %v916, %v913
    %v1010 = vpack.c.b16 %v917, %v914
    %v1011 = vpack.c.b16 %v918, %v915
    %v1012 = vpack.c.b16 %v922, %v919
    %v1013 = vpack.c.b16 %v923, %v920
    %v1014 = vpack.c.b16 %v924, %v921
    %v1015 = vpack.c.b16 %v928, %v925
    %v1016 = vpack.c.b16 %v929, %v926
    %v1017 = vpack.c.b16 %v930, %v927
    %v1018 = vpack.c.b16 %v934, %v931
    %v1019 = vpack.c.b16 %v935, %v932
    %v1020 = vpack.c.b16 %v936, %v933
    %v1021 = vpack.c.b16 %v940, %v937
    %v1022 = vpack.c.b16 %v941, %v938
    %v1023 = vpack.c.b16 %v942, %v939
    %v1024 = vpack.c.b16 %v946, %v943
    %v1025 = vpack.c.b16 %v947, %v944
    %v1026 = vpack.c.b16 %v948, %v945
    %v1027 = vpack.c.b16 %v952, %v949
    %v1028 = vpack.c.b16 %v953, %v950
    %v1029 = vpack.c.b16 %v954, %v951
    %v1030 = vpack.c.b16 %v958, %v955
    %v1031 = vpack.c.b16 %v959, %v956
    %v1032 = vpack.c.b16 %v960, %v957
    %v1033 = vpack.c.b16 %v964, %v961
    %v1034 = vpack.c.b16 %v965, %v962
    %v1035 = vpack.c.b16 %v966, %v963
    %v1036 = vpack.c.b16 %v970, %v967
    %v1037 = vpack.c.b16 %v971, %v968
    %v1038 = vpack.c.b16 %v972, %v969
    %v1039 = vpack.c.b16 %v976, %v973
    %v1040 = vpack.c.b16 %v977, %v974
    %v1041 = vpack.c.b16 %v978, %v975
    %v1042 = vpack.c.b16 %v982, %v979
    %v1043 = vpack.c.b16 %v983, %v980
    %v1044 = vpack.c.b16 %v984, %v981
    %v1045 = vpack.c.b16 %v988, %v985
    %v1046 = vpack.c.b16 %v989, %v986
    %v1047 = vpack.c.b16 %v990, %v987
    %v1048 = vpack.c.b16 %v994, %v991
    %v1049 = vpack.c.b16 %v995, %v992
    %v1050 = vpack.c.b16 %v996, %v993
    %v1051 = vpack.c.b16 %v1000, %v997
    %v1052 = vpack.c.b16 %v1001, %v998
    %v1053 = vpack.c.b16 %v1002, %v999
    %v1054 = vpack.c.b16 %v1006, %v1003
    %v1055 = vpack.c.b16 %v1007, %v1004
    %v1056 = vpack.c.b16 %v1008, %v1005
    %1105 = vmatprep.subr.bf16.mxu0 %v1031
    %1106 = vmatpush1.bf16.msra.mxu0 %v1030
    %1107 = vmatprep.subr.bf16.mxu0 %v1028
    %1108 = vmatpush1.bf16.msra.mxu0 %v1027
    %1109 = vmatprep.subr.bf16.mxu0 %v1025
    %1110 = vmatpush1.bf16.msra.mxu0 %v1024
    %1111 = vmatprep.subr.bf16.mxu0 %v1022
    %1112 = vmatpush1.bf16.msra.mxu0 %v1021
    %1113 = vmatprep.subr.bf16.mxu0 %v1019
    %1114 = vmatpush1.bf16.msra.mxu0 %v1018
    %1115 = vmatprep.subr.bf16.mxu0 %v1016
    %1116 = vmatpush1.bf16.msra.mxu0 %v1015
    %1117 = vmatprep.subr.bf16.mxu0 %v1013
    %1118 = vmatpush1.bf16.msra.mxu0 %v1012
    %1119 = vmatprep.subr.bf16.mxu0 %v1010
    %1120 = vmatpush1.bf16.msra.mxu0 %v1009
    %1121 = vmatprep.subr.bf16.mxu0 %v1055
    %1122 = vmatpush2.bf16.msra.mxu0 %v1054
    %1123 = vmatprep.subr.bf16.mxu0 %v1052
    %1124 = vmatpush2.bf16.msra.mxu0 %v1051
    %1125 = vmatprep.subr.bf16.mxu0 %v1049
    %1126 = vmatpush2.bf16.msra.mxu0 %v1048
    %1127 = vmatprep.subr.bf16.mxu0 %v1046
    %1128 = vmatpush2.bf16.msra.mxu0 %v1045
    %1129 = vmatprep.subr.bf16.mxu0 %v1043
    %1130 = vmatpush2.bf16.msra.mxu0 %v1042
    %1131 = vmatprep.subr.bf16.mxu0 %v1040
    %1132 = vmatpush2.bf16.msra.mxu0 %v1039
    %1133 = vmatprep.subr.bf16.mxu0 %v1037
    %1134 = vmatpush2.bf16.msra.mxu0 %v1036
    %1135 = vmatprep.subr.bf16.mxu0 %v1034
    %1136 = vmatpush2.bf16.msra.mxu0 %v1033
    %1137 = vmatprep.mubr.bf16.mxu0 %v848
    %1138 = vmatmul.mubr.bf16.gmra.mxu0 %v847
    %v1139 = vpop.f32.mrf.mxu0
    %v1140 = vadd.f32 0.0, %v1139
    %v1141 = vpop.f32.mrf.mxu0
    %v1142 = vadd.f32 0.0, %v1141
    %v1143 = vpop.f32.mrf.mxu0
    %v1144 = vpop.f32.mrf.mxu0
    %1145 = vdwg.mxu0
    %1146 = vmatprep.subr.bf16.mxu0 0
    %1147 = vmatpush1.bf16.msra.mxu0 %v1032
    %1148 = vmatprep.subr.bf16.mxu0 0
    %1149 = vmatpush1.bf16.msra.mxu0 %v1029
    %1150 = vmatprep.subr.bf16.mxu0 0
    %1151 = vmatpush1.bf16.msra.mxu0 %v1026
    %1152 = vmatprep.subr.bf16.mxu0 0
    %1153 = vmatpush1.bf16.msra.mxu0 %v1023
    %1154 = vmatprep.subr.bf16.mxu0 0
    %1155 = vmatpush1.bf16.msra.mxu0 %v1020
    %1156 = vmatprep.subr.bf16.mxu0 0
    %1157 = vmatpush1.bf16.msra.mxu0 %v1017
    %1158 = vmatprep.subr.bf16.mxu0 0
    %1159 = vmatpush1.bf16.msra.mxu0 %v1014
    %1160 = vmatprep.subr.bf16.mxu0 0
    %1161 = vmatpush1.bf16.msra.mxu0 %v1011
    %1162 = vmatprep.subr.bf16.mxu0 0
    %1163 = vmatpush2.bf16.msra.mxu0 %v1056
    %1164 = vmatprep.subr.bf16.mxu0 0
    %1165 = vmatpush2.bf16.msra.mxu0 %v1053
    %1166 = vmatprep.subr.bf16.mxu0 0
    %1167 = vmatpush2.bf16.msra.mxu0 %v1050
    %1168 = vmatprep.subr.bf16.mxu0 0
    %1169 = vmatpush2.bf16.msra.mxu0 %v1047
    %1170 = vmatprep.subr.bf16.mxu0 0
    %1171 = vmatpush2.bf16.msra.mxu0 %v1044
    %1172 = vmatprep.subr.bf16.mxu0 0
    %1173 = vmatpush2.bf16.msra.mxu0 %v1041
    %1174 = vmatprep.subr.bf16.mxu0 0
    %1175 = vmatpush2.bf16.msra.mxu0 %v1038
    %1176 = vmatprep.subr.bf16.mxu0 0
    %1177 = vmatpush2.bf16.msra.mxu0 %v1035
    %1178 = vmatprep.mubr.bf16.mxu0 %v848
    %1179 = vmatmul.mubr.bf16.gmra.mxu0 %v847
    %v1180 = vpop.f32.mrf.mxu0
    %v1181 = vadd.f32 0.0, %v1180
    %v1182 = vpop.f32.mrf.mxu0
    %v1183 = vpop.f32.mrf.mxu0
    %v1184 = vpop.f32.mrf.mxu0
    %1185 = vdwg.mxu0
    %v1186 = vadd.f32 %v801, %v1140
    %v1187 = vadd.f32 %v803, %v1142
    %v1188 = vadd.f32 %v842, %v1181
    %v1190 = vlaneseq
    %v1191 = vshrl.u32 %v1190, 7
    %v1192 = vsub.s32 0, %v1191
    %v1193 = vrot.slane %v51, %v1192
    %v1194 = vlaneseq
    %v1195 = vshrl.u32 %v1194, 7
    %v1196 = vsub.s32 1, %v1195
    %v1197 = vrot.slane %v51, %v1196
    %v1198 = vlaneseq
    %v1199 = vshrl.u32 %v1198, 7
    %v1200 = vsub.s32 2, %v1199
    %v1201 = vrot.slane %v51, %v1200
    %v1205 = vadd.f32 %v1186, %v1193
    %v1206 = vadd.f32 %v1187, %v1197
    %v1207 = vadd.f32 %v1188, %v1201
    %v1208 = vmul.f32 %v1205, 0.5
    %v1209 = vtanh.pop %v1208
    %v1210 = vadd.f32 %v1209, 1.0
    %v1211 = vmul.f32 %v1210, 0.5
    %v1212 = vtanh.pop %v1206
    %v1213 = vmul.f32 %v1211, %v1212
    %v1214 = vmul.f32 %v1207, 0.5
    %v1215 = vtanh.pop %v1214
    %v1216 = vadd.f32 %v1215, 1.0
    %v1217 = vmul.f32 %v1216, 0.5
    %v1218 = vtanh.pop %v1213
    %v1219 = vmul.f32 %v1217, %v1218
    %v1220 = vpack.c.bf16 %v1219, %v1219
    %v1222 = vlaneseq
    %v1223 = vshrl.u32 %v1222, 7
    %v1224 = vsub.s32 0, %v1223
    %v1225 = vrot.slane %v53, %v1224
    %v1226 = vlaneseq
    %v1227 = vshrl.u32 %v1226, 7
    %v1228 = vsub.s32 1, %v1227
    %v1229 = vrot.slane %v53, %v1228
    %v1230 = vlaneseq
    %v1231 = vshrl.u32 %v1230, 7
    %v1232 = vsub.s32 2, %v1231
    %v1233 = vrot.slane %v53, %v1232
    %v1269 = vunpack.c.l.b16 %v132
    %v1270 = vunpack.c.h.b16 %v132
    %v1271 = vunpack.c.l.b16 %v133
    %v1272 = vunpack.c.l.b16 %v134
    %v1273 = vunpack.c.h.b16 %v134
    %v1274 = vunpack.c.l.b16 %v135
    %v1275 = vunpack.c.l.b16 %v136
    %v1276 = vunpack.c.h.b16 %v136
    %v1277 = vunpack.c.l.b16 %v137
    %v1278 = vunpack.c.l.b16 %v138
    %v1279 = vunpack.c.h.b16 %v138
    %v1280 = vunpack.c.l.b16 %v139
    %v1281 = vunpack.c.l.b16 %v140
    %v1282 = vunpack.c.h.b16 %v140
    %v1283 = vunpack.c.l.b16 %v141
    %v1284 = vunpack.c.l.b16 %v142
    %v1285 = vunpack.c.h.b16 %v142
    %v1286 = vunpack.c.l.b16 %v143
    %v1287 = vunpack.c.l.b16 %v144
    %v1288 = vunpack.c.h.b16 %v144
    %v1289 = vunpack.c.l.b16 %v145
    %v1290 = vunpack.c.l.b16 %v146
    %v1291 = vunpack.c.h.b16 %v146
    %v1292 = vunpack.c.l.b16 %v147
    %v1293 = vunpack.c.l.b16 %v148
    %v1294 = vunpack.c.h.b16 %v148
    %v1295 = vunpack.c.l.b16 %v149
    %v1296 = vunpack.c.l.b16 %v150
    %v1297 = vunpack.c.h.b16 %v150
    %v1298 = vunpack.c.l.b16 %v151
    %v1299 = vunpack.c.l.b16 %v152
    %v1300 = vunpack.c.h.b16 %v152
    %v1301 = vunpack.c.l.b16 %v153
    %v1302 = vunpack.c.l.b16 %v154
    %v1303 = vunpack.c.h.b16 %v154
    %v1304 = vunpack.c.l.b16 %v155
    %v1305 = vunpack.c.l.b16 %v156
    %v1306 = vunpack.c.h.b16 %v156
    %v1307 = vunpack.c.l.b16 %v157
    %v1308 = vunpack.c.l.b16 %v158
    %v1309 = vunpack.c.h.b16 %v158
    %v1310 = vunpack.c.l.b16 %v159
    %v1311 = vunpack.c.l.b16 %v160
    %v1312 = vunpack.c.h.b16 %v160
    %v1313 = vunpack.c.l.b16 %v161
    %v1314 = vunpack.c.l.b16 %v162
    %v1315 = vunpack.c.h.b16 %v162
    %v1316 = vunpack.c.l.b16 %v163
    %v1317 = vpack.c.b16 %v1272, %v1269
    %v1318 = vpack.c.b16 %v1273, %v1270
    %v1319 = vpack.c.b16 %v1274, %v1271
    %v1320 = vpack.c.b16 %v1278, %v1275
    %v1321 = vpack.c.b16 %v1279, %v1276
    %v1322 = vpack.c.b16 %v1280, %v1277
    %v1323 = vpack.c.b16 %v1284, %v1281
    %v1324 = vpack.c.b16 %v1285, %v1282
    %v1325 = vpack.c.b16 %v1286, %v1283
    %v1326 = vpack.c.b16 %v1290, %v1287
    %v1327 = vpack.c.b16 %v1291, %v1288
    %v1328 = vpack.c.b16 %v1292, %v1289
    %v1329 = vpack.c.b16 %v1296, %v1293
    %v1330 = vpack.c.b16 %v1297, %v1294
    %v1331 = vpack.c.b16 %v1298, %v1295
    %v1332 = vpack.c.b16 %v1302, %v1299
    %v1333 = vpack.c.b16 %v1303, %v1300
    %v1334 = vpack.c.b16 %v1304, %v1301
    %v1335 = vpack.c.b16 %v1308, %v1305
    %v1336 = vpack.c.b16 %v1309, %v1306
    %v1337 = vpack.c.b16 %v1310, %v1307
    %v1338 = vpack.c.b16 %v1314, %v1311
    %v1339 = vpack.c.b16 %v1315, %v1312
    %v1340 = vpack.c.b16 %v1316, %v1313
    %1365 = vmatprep.subr.bf16.mxu0 %v1339
    %1366 = vmatpush1.bf16.msra.mxu0 %v1338
    %1367 = vmatprep.subr.bf16.mxu0 %v1336
    %1368 = vmatpush1.bf16.msra.mxu0 %v1335
    %1369 = vmatprep.subr.bf16.mxu0 %v1333
    %1370 = vmatpush1.bf16.msra.mxu0 %v1332
    %1371 = vmatprep.subr.bf16.mxu0 %v1330
    %1372 = vmatpush1.bf16.msra.mxu0 %v1329
    %1373 = vmatprep.subr.bf16.mxu0 %v1327
    %1374 = vmatpush1.bf16.msra.mxu0 %v1326
    %1375 = vmatprep.subr.bf16.mxu0 %v1324
    %1376 = vmatpush1.bf16.msra.mxu0 %v1323
    %1377 = vmatprep.subr.bf16.mxu0 %v1321
    %1378 = vmatpush1.bf16.msra.mxu0 %v1320
    %1379 = vmatprep.subr.bf16.mxu0 %v1318
    %1380 = vmatpush1.bf16.msra.mxu0 %v1317
    %1381 = vmatprep.subr.bf16.mxu0 0
    %1382 = vmatpush2.bf16.msra.mxu0 0
    %1383 = vmatprep.subr.bf16.mxu0 0
    %1384 = vmatpush2.bf16.msra.mxu0 0
    %1385 = vmatprep.subr.bf16.mxu0 0
    %1386 = vmatpush2.bf16.msra.mxu0 0
    %1387 = vmatprep.subr.bf16.mxu0 0
    %1388 = vmatpush2.bf16.msra.mxu0 0
    %1389 = vmatprep.subr.bf16.mxu0 0
    %1390 = vmatpush2.bf16.msra.mxu0 0
    %1391 = vmatprep.subr.bf16.mxu0 0
    %1392 = vmatpush2.bf16.msra.mxu0 0
    %1393 = vmatprep.subr.bf16.mxu0 0
    %1394 = vmatpush2.bf16.msra.mxu0 0
    %1395 = vmatprep.subr.bf16.mxu0 0
    %1396 = vmatpush2.bf16.msra.mxu0 0
    %1397 = vmatprep.mubr.bf16.mxu0 0
    %1398 = vmatmul.mubr.bf16.gmra.mxu0 %v1220
    %v1399 = vpop.f32.mrf.mxu0
    %v1400 = vadd.f32 %v1225, %v1399
    %v1401 = vpop.f32.mrf.mxu0
    %v1402 = vadd.f32 %v1229, %v1401
    %v1403 = vpop.f32.mrf.mxu0
    %v1404 = vpop.f32.mrf.mxu0
    %1405 = vdwg.mxu0
    %1406 = vmatprep.subr.bf16.mxu0 0
    %1407 = vmatpush1.bf16.msra.mxu0 %v1340
    %1408 = vmatprep.subr.bf16.mxu0 0
    %1409 = vmatpush1.bf16.msra.mxu0 %v1337
    %1410 = vmatprep.subr.bf16.mxu0 0
    %1411 = vmatpush1.bf16.msra.mxu0 %v1334
    %1412 = vmatprep.subr.bf16.mxu0 0
    %1413 = vmatpush1.bf16.msra.mxu0 %v1331
    %1414 = vmatprep.subr.bf16.mxu0 0
    %1415 = vmatpush1.bf16.msra.mxu0 %v1328
    %1416 = vmatprep.subr.bf16.mxu0 0
    %1417 = vmatpush1.bf16.msra.mxu0 %v1325
    %1418 = vmatprep.subr.bf16.mxu0 0
    %1419 = vmatpush1.bf16.msra.mxu0 %v1322
    %1420 = vmatprep.subr.bf16.mxu0 0
    %1421 = vmatpush1.bf16.msra.mxu0 %v1319
    %1422 = vmatprep.subr.bf16.mxu0 0
    %1423 = vmatpush2.bf16.msra.mxu0 0
    %1424 = vmatprep.subr.bf16.mxu0 0
    %1425 = vmatpush2.bf16.msra.mxu0 0
    %1426 = vmatprep.subr.bf16.mxu0 0
    %1427 = vmatpush2.bf16.msra.mxu0 0
    %1428 = vmatprep.subr.bf16.mxu0 0
    %1429 = vmatpush2.bf16.msra.mxu0 0
    %1430 = vmatprep.subr.bf16.mxu0 0
    %1431 = vmatpush2.bf16.msra.mxu0 0
    %1432 = vmatprep.subr.bf16.mxu0 0
    %1433 = vmatpush2.bf16.msra.mxu0 0
    %1434 = vmatprep.subr.bf16.mxu0 0
    %1435 = vmatpush2.bf16.msra.mxu0 0
    %1436 = vmatprep.subr.bf16.mxu0 0
    %1437 = vmatpush2.bf16.msra.mxu0 0
    %1438 = vmatprep.mubr.bf16.mxu0 0
    %1439 = vmatmul.mubr.bf16.gmra.mxu0 %v1220
    %v1440 = vpop.f32.mrf.mxu0
    %v1441 = vadd.f32 %v1233, %v1440
    %v1442 = vpop.f32.mrf.mxu0
    %v1443 = vpop.f32.mrf.mxu0
    %v1444 = vpop.f32.mrf.mxu0
    %1445 = vdwg.mxu0
    %v1446 = vmul.f32 %v1400, 0.5
    %v1447 = vtanh.pop %v1446
    %v1448 = vadd.f32 %v1447, 1.0
    %v1449 = vmul.f32 %v1448, 0.5
    %v1450 = vtanh.pop %v1402
    %v1451 = vmul.f32 %v1449, %v1450
    %v1452 = vmul.f32 %v1441, 0.5
    %v1453 = vtanh.pop %v1452
    %v1454 = vadd.f32 %v1453, 1.0
    %v1455 = vmul.f32 %v1454, 0.5
    %v1456 = vtanh.pop %v1451
    %v1457 = vmul.f32 %v1455, %v1456
    %v1458 = vpack.c.bf16 %v1457, %v1457
    %v1460 = vlaneseq
    %v1461 = vshrl.u32 %v1460, 7
    %v1462 = vsub.s32 0, %v1461
    %v1463 = vrot.slane %v55, %v1462
    %v1464 = vlaneseq
    %v1465 = vshrl.u32 %v1464, 7
    %v1466 = vsub.s32 1, %v1465
    %v1467 = vrot.slane %v55, %v1466
    %v1468 = vlaneseq
    %v1469 = vshrl.u32 %v1468, 7
    %v1470 = vsub.s32 2, %v1469
    %v1471 = vrot.slane %v55, %v1470
    %v1507 = vunpack.c.l.b16 %v164
    %v1508 = vunpack.c.h.b16 %v164
    %v1509 = vunpack.c.l.b16 %v165
    %v1510 = vunpack.c.l.b16 %v166
    %v1511 = vunpack.c.h.b16 %v166
    %v1512 = vunpack.c.l.b16 %v167
    %v1513 = vunpack.c.l.b16 %v168
    %v1514 = vunpack.c.h.b16 %v168
    %v1515 = vunpack.c.l.b16 %v169
    %v1516 = vunpack.c.l.b16 %v170
    %v1517 = vunpack.c.h.b16 %v170
    %v1518 = vunpack.c.l.b16 %v171
    %v1519 = vunpack.c.l.b16 %v172
    %v1520 = vunpack.c.h.b16 %v172
    %v1521 = vunpack.c.l.b16 %v173
    %v1522 = vunpack.c.l.b16 %v174
    %v1523 = vunpack.c.h.b16 %v174
    %v1524 = vunpack.c.l.b16 %v175
    %v1525 = vunpack.c.l.b16 %v176
    %v1526 = vunpack.c.h.b16 %v176
    %v1527 = vunpack.c.l.b16 %v177
    %v1528 = vunpack.c.l.b16 %v178
    %v1529 = vunpack.c.h.b16 %v178
    %v1530 = vunpack.c.l.b16 %v179
    %v1531 = vunpack.c.l.b16 %v180
    %v1532 = vunpack.c.h.b16 %v180
    %v1533 = vunpack.c.l.b16 %v181
    %v1534 = vunpack.c.l.b16 %v182
    %v1535 = vunpack.c.h.b16 %v182
    %v1536 = vunpack.c.l.b16 %v183
    %v1537 = vunpack.c.l.b16 %v184
    %v1538 = vunpack.c.h.b16 %v184
    %v1539 = vunpack.c.l.b16 %v185
    %v1540 = vunpack.c.l.b16 %v186
    %v1541 = vunpack.c.h.b16 %v186
    %v1542 = vunpack.c.l.b16 %v187
    %v1543 = vunpack.c.l.b16 %v188
    %v1544 = vunpack.c.h.b16 %v188
    %v1545 = vunpack.c.l.b16 %v189
    %v1546 = vunpack.c.l.b16 %v190
    %v1547 = vunpack.c.h.b16 %v190
    %v1548 = vunpack.c.l.b16 %v191
    %v1549 = vunpack.c.l.b16 %v192
    %v1550 = vunpack.c.h.b16 %v192
    %v1551 = vunpack.c.l.b16 %v193
    %v1552 = vunpack.c.l.b16 %v194
    %v1553 = vunpack.c.h.b16 %v194
    %v1554 = vunpack.c.l.b16 %v195
    %v1555 = vpack.c.b16 %v1510, %v1507
    %v1556 = vpack.c.b16 %v1511, %v1508
    %v1557 = vpack.c.b16 %v1512, %v1509
    %v1558 = vpack.c.b16 %v1516, %v1513
    %v1559 = vpack.c.b16 %v1517, %v1514
    %v1560 = vpack.c.b16 %v1518, %v1515
    %v1561 = vpack.c.b16 %v1522, %v1519
    %v1562 = vpack.c.b16 %v1523, %v1520
    %v1563 = vpack.c.b16 %v1524, %v1521
    %v1564 = vpack.c.b16 %v1528, %v1525
    %v1565 = vpack.c.b16 %v1529, %v1526
    %v1566 = vpack.c.b16 %v1530, %v1527
    %v1567 = vpack.c.b16 %v1534, %v1531
    %v1568 = vpack.c.b16 %v1535, %v1532
    %v1569 = vpack.c.b16 %v1536, %v1533
    %v1570 = vpack.c.b16 %v1540, %v1537
    %v1571 = vpack.c.b16 %v1541, %v1538
    %v1572 = vpack.c.b16 %v1542, %v1539
    %v1573 = vpack.c.b16 %v1546, %v1543
    %v1574 = vpack.c.b16 %v1547, %v1544
    %v1575 = vpack.c.b16 %v1548, %v1545
    %v1576 = vpack.c.b16 %v1552, %v1549
    %v1577 = vpack.c.b16 %v1553, %v1550
    %v1578 = vpack.c.b16 %v1554, %v1551
    %1603 = vmatprep.subr.bf16.mxu0 %v1577
    %1604 = vmatpush1.bf16.msra.mxu0 %v1576
    %1605 = vmatprep.subr.bf16.mxu0 %v1574
    %1606 = vmatpush1.bf16.msra.mxu0 %v1573
    %1607 = vmatprep.subr.bf16.mxu0 %v1571
    %1608 = vmatpush1.bf16.msra.mxu0 %v1570
    %1609 = vmatprep.subr.bf16.mxu0 %v1568
    %1610 = vmatpush1.bf16.msra.mxu0 %v1567
    %1611 = vmatprep.subr.bf16.mxu0 %v1565
    %1612 = vmatpush1.bf16.msra.mxu0 %v1564
    %1613 = vmatprep.subr.bf16.mxu0 %v1562
    %1614 = vmatpush1.bf16.msra.mxu0 %v1561
    %1615 = vmatprep.subr.bf16.mxu0 %v1559
    %1616 = vmatpush1.bf16.msra.mxu0 %v1558
    %1617 = vmatprep.subr.bf16.mxu0 %v1556
    %1618 = vmatpush1.bf16.msra.mxu0 %v1555
    %1619 = vmatprep.subr.bf16.mxu0 0
    %1620 = vmatpush2.bf16.msra.mxu0 0
    %1621 = vmatprep.subr.bf16.mxu0 0
    %1622 = vmatpush2.bf16.msra.mxu0 0
    %1623 = vmatprep.subr.bf16.mxu0 0
    %1624 = vmatpush2.bf16.msra.mxu0 0
    %1625 = vmatprep.subr.bf16.mxu0 0
    %1626 = vmatpush2.bf16.msra.mxu0 0
    %1627 = vmatprep.subr.bf16.mxu0 0
    %1628 = vmatpush2.bf16.msra.mxu0 0
    %1629 = vmatprep.subr.bf16.mxu0 0
    %1630 = vmatpush2.bf16.msra.mxu0 0
    %1631 = vmatprep.subr.bf16.mxu0 0
    %1632 = vmatpush2.bf16.msra.mxu0 0
    %1633 = vmatprep.subr.bf16.mxu0 0
    %1634 = vmatpush2.bf16.msra.mxu0 0
    %1635 = vmatprep.mubr.bf16.mxu0 0
    %1636 = vmatmul.mubr.bf16.gmra.mxu0 %v1458
    %v1637 = vpop.f32.mrf.mxu0
    %v1638 = vadd.f32 %v1463, %v1637
    %v1639 = vpop.f32.mrf.mxu0
    %v1640 = vadd.f32 %v1467, %v1639
    %v1641 = vpop.f32.mrf.mxu0
    %v1642 = vpop.f32.mrf.mxu0
    %1643 = vdwg.mxu0
    %1644 = vmatprep.subr.bf16.mxu0 0
    %1645 = vmatpush1.bf16.msra.mxu0 %v1578
    %1646 = vmatprep.subr.bf16.mxu0 0
    %1647 = vmatpush1.bf16.msra.mxu0 %v1575
    %1648 = vmatprep.subr.bf16.mxu0 0
    %1649 = vmatpush1.bf16.msra.mxu0 %v1572
    %1650 = vmatprep.subr.bf16.mxu0 0
    %1651 = vmatpush1.bf16.msra.mxu0 %v1569
    %1652 = vmatprep.subr.bf16.mxu0 0
    %1653 = vmatpush1.bf16.msra.mxu0 %v1566
    %1654 = vmatprep.subr.bf16.mxu0 0
    %1655 = vmatpush1.bf16.msra.mxu0 %v1563
    %1656 = vmatprep.subr.bf16.mxu0 0
    %1657 = vmatpush1.bf16.msra.mxu0 %v1560
    %1658 = vmatprep.subr.bf16.mxu0 0
    %1659 = vmatpush1.bf16.msra.mxu0 %v1557
    %1660 = vmatprep.subr.bf16.mxu0 0
    %1661 = vmatpush2.bf16.msra.mxu0 0
    %1662 = vmatprep.subr.bf16.mxu0 0
    %1663 = vmatpush2.bf16.msra.mxu0 0
    %1664 = vmatprep.subr.bf16.mxu0 0
    %1665 = vmatpush2.bf16.msra.mxu0 0
    %1666 = vmatprep.subr.bf16.mxu0 0
    %1667 = vmatpush2.bf16.msra.mxu0 0
    %1668 = vmatprep.subr.bf16.mxu0 0
    %1669 = vmatpush2.bf16.msra.mxu0 0
    %1670 = vmatprep.subr.bf16.mxu0 0
    %1671 = vmatpush2.bf16.msra.mxu0 0
    %1672 = vmatprep.subr.bf16.mxu0 0
    %1673 = vmatpush2.bf16.msra.mxu0 0
    %1674 = vmatprep.subr.bf16.mxu0 0
    %1675 = vmatpush2.bf16.msra.mxu0 0
    %1676 = vmatprep.mubr.bf16.mxu0 0
    %1677 = vmatmul.mubr.bf16.gmra.mxu0 %v1458
    %v1678 = vpop.f32.mrf.mxu0
    %v1679 = vadd.f32 %v1471, %v1678
    %v1680 = vpop.f32.mrf.mxu0
    %v1681 = vpop.f32.mrf.mxu0
    %v1682 = vpop.f32.mrf.mxu0
    %1683 = vdwg.mxu0
    %v1684 = vmul.f32 %v1638, 0.5
    %v1685 = vtanh.pop %v1684
    %v1686 = vadd.f32 %v1685, 1.0
    %v1687 = vmul.f32 %v1686, 0.5
    %v1688 = vtanh.pop %v1640
    %v1689 = vmul.f32 %v1687, %v1688
    %v1690 = vmul.f32 %v1679, 0.5
    %v1691 = vtanh.pop %v1690
    %v1692 = vadd.f32 %v1691, 1.0
    %v1693 = vmul.f32 %v1692, 0.5
    %v1694 = vtanh.pop %v1689
    %v1695 = vmul.f32 %v1693, %v1694
    %v1696 = vpack.c.bf16 %v1695, %v1695
    %1697 = vmatprep.subr.bf16.mxu0 0
    %1698 = vmatpush1.bf16.xpose.msra.mxu0 0
    %1699 = vmatprep.subr.bf16.mxu0 0
    %1700 = vmatpush1.bf16.xpose.msra.mxu0 0
    %1701 = vmatprep.subr.bf16.mxu0 0
    %1702 = vmatpush1.bf16.xpose.msra.mxu0 0
    %1703 = vmatprep.subr.bf16.mxu0 0
    %1704 = vmatpush1.bf16.xpose.msra.mxu0 0
    %1705 = vmatprep.subr.bf16.mxu0 0
    %1706 = vmatpush1.bf16.xpose.msra.mxu0 0
    %1707 = vmatprep.subr.bf16.mxu0 0
    %1708 = vmatpush1.bf16.xpose.msra.mxu0 0
    %1709 = vmatprep.subr.bf16.mxu0 0
    %1710 = vmatpush1.bf16.xpose.msra.mxu0 0
    %1711 = vmatprep.subr.bf16.mxu0 0
    %1712 = vmatpush1.bf16.xpose.msra.mxu0 %v203
    %1713 = vmatprep.subr.bf16.mxu0 0
    %1714 = vmatpush2.bf16.xpose.msra.mxu0 0
    %1715 = vmatprep.subr.bf16.mxu0 0
    %1716 = vmatpush2.bf16.xpose.msra.mxu0 0
    %1717 = vmatprep.subr.bf16.mxu0 0
    %1718 = vmatpush2.bf16.xpose.msra.mxu0 0
    %1719 = vmatprep.subr.bf16.mxu0 0
    %1720 = vmatpush2.bf16.xpose.msra.mxu0 0
    %1721 = vmatprep.subr.bf16.mxu0 0
    %1722 = vmatpush2.bf16.xpose.msra.mxu0 0
    %1723 = vmatprep.subr.bf16.mxu0 0
    %1724 = vmatpush2.bf16.xpose.msra.mxu0 0
    %1725 = vmatprep.subr.bf16.mxu0 0
    %1726 = vmatpush2.bf16.xpose.msra.mxu0 0
    %1727 = vmatprep.subr.bf16.mxu0 0
    %1728 = vmatpush2.bf16.xpose.msra.mxu0 0
    %1729 = vmatprep.mubr.bf16.mxu0 0
    %1730 = vmatmul.mubr.bf16.gmra.mxu0 %v1696
    %v1731 = vpop.f32.mrf.mxu0
    %v1732 = vadd.f32 0.0, %v1731
    %v1733 = vpop.f32.mrf.mxu0
    %v1734 = vpop.f32.mrf.mxu0
    %v1735 = vpop.f32.mrf.mxu0
    %1736 = vdwg.mxu0
    %v1737 = vadd.f32 %v1732, %v60
    %vm1738 = vcmask 25600
    %1739 = vst.msk [vmem:[#allocation7] sm:$0x3] %vm1738, %v1737
    // Predicated region
    $region30: #{lstm_rnn_forward.1} parent=1 // pred_check
      _
    $region31: #{lstm_rnn_forward.1} parent=1 // pred_check_branch
      %1741 = sbr.rel (0) target = $region33
    $region32: #{lstm_rnn_forward.1} parent=1 // pred_region
      %s1743 = ssub.s32 32, 32
      %1744 = vsyncadd [#allocation4], %s1743
      %s1746 = sshll.u32 [#allocation7], 4
      %s1747 = int_to_ptr.vmem [resolvable:$true] %s1746
      %1749 = dma.vmem_to_hbm [thread:$0]  %s1747, 32, %s5, [#allocation4]
    $region33: #{lstm_rnn_forward.1} parent=1 // pred_fallthru
      _
    // Predicated region
    $region34: #{lstm_rnn_forward.1} parent=1 // pred_check
      _
    $region35: #{lstm_rnn_forward.1} parent=1 // pred_check_branch
      %1751 = sbr.rel (0) target = $region37
    $region36: #{lstm_rnn_forward.1} parent=1 // pred_region
      %1752 = dma.done [#allocation4], 32
    $region37: #{lstm_rnn_forward.1} parent=1 // pred_fallthru
      _
    %1753 = vsyncpa [#allocation3], 1
    %1754 = vsyncpa [#allocation6], 1
    %1755 = vsyncpa [#allocation4], 1

</llo_original>
